<compile_context>
chip_gen: v5e
topology: v5e:2x2
jax: 0.10.0
libtpu: 0.0.40
codegen_flags: <defaults>
</compile_context>

<pallas_src>
import functools

import jax
import jax.numpy as jnp
import numpy as np
from jax import lax
from jax.experimental import pallas as pl
from jax.experimental.pallas import tpu as pltpu


# --------------------------------------------------------------------------
# In-kernel building blocks
# --------------------------------------------------------------------------
def _dx_fold(a):
    """(R, W, C) -> (R, W, 3C); lane group dx holds a[:, w+dx-1, :] (zero pad)."""
    R, W, C = a.shape
    z = jnp.zeros((R, 1, C), a.dtype)
    ap = jnp.concatenate([z, a, z], axis=1)                    # (R, W+2, C)
    return jnp.concatenate([ap[:, d:d + W, :] for d in range(3)], axis=-1)


# --------------------------------------------------------------------------
# Fused kernel: conv0+ReLU -> conv2+ReLU -> maxpool2x2 -> conv5
# --------------------------------------------------------------------------
def _vgg22_kernel(x_ref, w0_ref, b0_ref, w2_ref, b2_ref, w5_ref, b5_ref,
                  o_ref, *, H, W, TH):
    r = pl.program_id(1)
    row0 = r * TH

    # ---- conv0 (3 -> 64) + ReLU : single K=27 matmul ----------------------
    xt9 = x_ref[0]                                      # (TH+8, W, 9) bf16
    R0 = TH + 6
    patch0 = jnp.concatenate([xt9[dy:dy + R0] for dy in range(3)], axis=-1)
    a0 = jnp.dot(patch0.reshape(R0 * W, 27), w0_ref[...],
                 preferred_element_type=jnp.float32)
    a0 = jnp.maximum(a0 + b0_ref[...], 0.0).reshape(R0, W, 64)
    # Halo rows outside the real image must act as conv2's zero padding.
    g0 = (row0 - 3) + lax.broadcasted_iota(jnp.int32, (R0, 1, 1), 0)
    a0 = jnp.where((g0 >= 0) & (g0 < H), a0, 0.0).astype(jnp.bfloat16)

    # ---- conv2 (64 -> 64) + ReLU : dx folded into K, dy folded into N -----
    xd2 = _dx_fold(a0)                                  # (TH+6, W, 192)
    y2 = jnp.dot(xd2.reshape(R0 * W, 192), w2_ref[...],
                 preferred_element_type=jnp.float32).reshape(R0, W, 192)
    R2 = TH + 4
    a1 = (y2[0:R2, :, 0:64] + y2[1:R2 + 1, :, 64:128]
          + y2[2:R2 + 2, :, 128:192] + b2_ref[...])
    a1 = jnp.maximum(a1, 0.0)                           # (TH+4, W, 64) f32

    # ---- MaxPool 2x2 stride 2 (pairwise maxima) ----------------------------
    y = a1.reshape(R2 // 2, 2, W, 64)
    y = jnp.maximum(y[:, 0], y[:, 1])                   # (TH/2+2, W, 64)
    y = y.reshape(R2 // 2, W // 2, 2, 64)
    pooled = jnp.maximum(y[:, :, 0, :], y[:, :, 1, :])  # (TH/2+2, W/2, 64)
    Rp = R2 // 2
    # Pooled halo rows outside the real pooled map act as conv5 zero padding.
    gp = (r * (TH // 2) - 1) + lax.broadcasted_iota(jnp.int32, (Rp, 1, 1), 0)
    pooled = jnp.where((gp >= 0) & (gp < H // 2), pooled,
                       0.0).astype(jnp.bfloat16)

    # ---- conv5 (64 -> 128), no ReLU : dx in K, dy in N (aligned slices) ----
    xd5 = _dx_fold(pooled)                              # (TH/2+2, W/2, 192)
    y5 = jnp.dot(xd5.reshape(Rp * (W // 2), 192), w5_ref[...],
                 preferred_element_type=jnp.float32).reshape(Rp, W // 2, 384)
    R5 = TH // 2
    out = (y5[0:R5, :, 0:128] + y5[1:R5 + 1, :, 128:256]
           + y5[2:R5 + 2, :, 256:384] + b5_ref[...])
    o_ref[...] = out.reshape(1, R5, W // 2, 128).astype(o_ref.dtype)


# --------------------------------------------------------------------------
# Wrapper
# --------------------------------------------------------------------------
def _pick_row_tile(H, max_rows=32):
    # Cap chosen so the per-tile working set stays well under v7x's 64 MiB
    # VMEM even at 224x224; pass row_tile explicitly for bigger tiles on
    # v5e/v6e (128 MiB VMEM).
    th = 2
    for cand in range(2, min(H, max_rows) + 1, 2):
        if H % cand == 0:
            th = cand
    return th


def feature_extractor(x_nchw, params, *, row_tile=None, out_dtype=jnp.bfloat16):
    """Pallas forward of FeatureExtractor(vgg19, i=2, j=2): NCHW -> NCHW."""
    N, C, H, W = x_nchw.shape
    assert C == 3, "VGG-19 expects 3 input channels"
    assert H % 2 == 0 and W % 2 == 0
    TH = row_tile if row_tile is not None else _pick_row_tile(H)
    assert TH % 2 == 0 and H % TH == 0
    RT = H // TH

    # NHWC bf16; zero-pad 4 rows / 1 col per side; fold conv0's (dx, channel)
    # taps into the lane axis; materialise the overlapping (TH+8)-row slabs so
    # each grid step DMAs exactly its working set (no whole-image staging).
    x = jnp.transpose(x_nchw, (0, 2, 3, 1)).astype(jnp.bfloat16)
    xp = jnp.pad(x, ((0, 0), (4, 4), (1, 1), (0, 0)))           # (N, H+8, W+2, 3)
    x9 = jnp.concatenate([xp[:, :, d:d + W, :] for d in range(3)], axis=-1)
    slabs = jnp.stack([x9[:, t * TH:t * TH + TH + 8] for t in range(RT)],
                      axis=1).reshape(N * RT, TH + 8, W, 9)     # bf16

    out_bytes = N * (H // 2) * (W // 2) * 128 * jnp.dtype(out_dtype).itemsize
    w_bytes = sum(int(v.size) * v.dtype.itemsize for v in params.values())
    cost = pl.CostEstimate(
        flops=(2 * N * H * W * 64 * (27 + 576)
               + 2 * N * (H // 2) * (W // 2) * 576 * 128),
        transcendentals=0,
        bytes_accessed=int(slabs.size) * 2 + w_bytes + out_bytes)

    kernel = functools.partial(_vgg22_kernel, H=H, W=W, TH=TH)
    out = pl.pallas_call(
        kernel,
        out_shape=jax.ShapeDtypeStruct((N, H // 2, W // 2, 128), out_dtype),
        grid=(N, RT),
        in_specs=[
            pl.BlockSpec((1, TH + 8, W, 9), lambda n, r: (n * RT + r, 0, 0, 0)),
            pl.BlockSpec((27, 64), lambda n, r: (0, 0)),
            pl.BlockSpec((1, 64), lambda n, r: (0, 0)),
            pl.BlockSpec((192, 192), lambda n, r: (0, 0)),
            pl.BlockSpec((1, 64), lambda n, r: (0, 0)),
            pl.BlockSpec((192, 384), lambda n, r: (0, 0)),
            pl.BlockSpec((1, 128), lambda n, r: (0, 0)),
        ],
        out_specs=pl.BlockSpec((1, TH // 2, W // 2, 128),
                               lambda n, r: (n, r, 0, 0)),
        compiler_params=pltpu.CompilerParams(
            dimension_semantics=("parallel", "parallel"),
            vmem_limit_bytes=48 * 1024 * 1024),
        cost_estimate=cost,
    )(slabs, params["w0"], params["b0"], params["w2"], params["b2"],
      params["w5"], params["b5"])
    return jnp.transpose(out, (0, 3, 1, 2))                 # back to NCHW


# --------------------------------------------------------------------------
# Parameters (deterministic synthetic, pre-packed for the kernel)
# --------------------------------------------------------------------------
def init_params(key):
    # w0: (27, 64)   full-im2col packing, K index = dy*9 + dx*3 + cin
    # w2: (192, 192) K = dx*64 + cin, N = dy*64 + cout   (dy folded into N)
    # w5: (192, 384) K = dx*64 + cin, N = dy*128 + cout
    # Weights bf16 (MXU inputs); biases f32 (f32 epilogue math).
    ks = jax.random.split(key, 6)

    def conv_w(k, shp):
        fan_in = shp[0] * shp[1] * shp[2]
        return jax.random.normal(k, shp, jnp.float32) * (2.0 / fan_in) ** 0.5

    w0 = conv_w(ks[0], (3, 3, 3, 64))        # HWIO [dy, dx, cin, cout]
    w2 = conv_w(ks[1], (3, 3, 64, 64))
    w5 = conv_w(ks[2], (3, 3, 64, 128))
    return {
        "w0": w0.reshape(27, 64).astype(jnp.bfloat16),
        "w2": jnp.transpose(w2, (1, 2, 0, 3)).reshape(192, 192)
                 .astype(jnp.bfloat16),
        "w5": jnp.transpose(w5, (1, 2, 0, 3)).reshape(192, 384)
                 .astype(jnp.bfloat16),
        "b0": jax.random.normal(ks[3], (1, 64), jnp.float32) * 0.01,
        "b2": jax.random.normal(ks[4], (1, 64), jnp.float32) * 0.01,
        "b5": jax.random.normal(ks[5], (1, 128), jnp.float32) * 0.01,
    }


# --------------------------------------------------------------------------
# Pure-JAX reference (same bf16-input / f32-accumulate numerics)
# --------------------------------------------------------------------------
def reference(x_nchw, params):
    x = jnp.transpose(x_nchw, (0, 2, 3, 1)).astype(jnp.bfloat16)
    w0 = params["w0"].reshape(3, 3, 3, 64)
    w2 = jnp.transpose(params["w2"].reshape(3, 64, 3, 64), (2, 0, 1, 3))
    w5 = jnp.transpose(params["w5"].reshape(3, 64, 3, 128), (2, 0, 1, 3))

    def conv(a, w, b):
        y = lax.conv_general_dilated(
            a, w, window_strides=(1, 1), padding="SAME",
            dimension_numbers=("NHWC", "HWIO", "NHWC"),
            preferred_element_type=jnp.float32)
        return y + b[0][None, None, None, :]

    a = jnp.maximum(conv(x, w0, params["b0"]), 0.0)
    a = jnp.maximum(conv(a.astype(jnp.bfloat16), w2, params["b2"]), 0.0)
    a = lax.reduce_window(a, -jnp.inf, lax.max,
                          (1, 2, 2, 1), (1, 2, 2, 1), "VALID")
    a = conv(a.astype(jnp.bfloat16), w5, params["b5"])
    return jnp.transpose(a, (0, 3, 1, 2))


if __name__ == "__main__":
    key = jax.random.PRNGKey(0)
    k_x, k_p = jax.random.split(key)

    # Small VGG-consistent input: batch=2, 3 channels, 16x16 spatial (NCHW).
    x = jax.random.normal(k_x, (2, 3, 16, 16), jnp.float32)
    params = init_params(k_p)

    # row_tile=8 -> two spatial row tiles per image, exercising the halo path.
    fe = jax.jit(functools.partial(feature_extractor, row_tile=8))
    out = fe(x, params)
    jax.block_until_ready(out)
    assert out.shape == (2, 128, 8, 8)

    ref = reference(x, params)
    # bf16 matmul inputs + bf16 output store -> loosened tolerance vs. f32 ref.
    np.testing.assert_allclose(np.asarray(out.astype(jnp.float32)),
                               np.asarray(ref), rtol=3e-2, atol=3e-2)

    print("KERNEL_OK")
</pallas_src>

<mosaic_0001>
module attributes {stable_mosaic.version = 11 : i64} {
  func.func @_vgg22_kernel(%arg0: i32, %arg1: i32, %arg2: memref<1x16x16x9xbf16, #tpu.memory_space<vmem>>, %arg3: memref<27x64xbf16, #tpu.memory_space<vmem>>, %arg4: memref<1x64xf32, #tpu.memory_space<vmem>>, %arg5: memref<192x192xbf16, #tpu.memory_space<vmem>>, %arg6: memref<1x64xf32, #tpu.memory_space<vmem>>, %arg7: memref<192x384xbf16, #tpu.memory_space<vmem>>, %arg8: memref<1x128xf32, #tpu.memory_space<vmem>>, %arg9: memref<1x4x8x128xbf16, #tpu.memory_space<vmem>>) attributes {dimension_semantics = [#tpu.dimension_semantics<parallel>, #tpu.dimension_semantics<parallel>], iteration_bounds = array<i64: 2, 2>, scalar_prefetch = 0 : i64, scratch_operands = 0 : i64, tpu.core_type = #tpu.core_type<tc>, window_params = [{transform_indices = @transform_0, window_bounds = array<i64: 1, 16, 16, 9>}, {pipeline_mode = #tpu.pipeline_mode<synchronous>, transform_indices = @transform_1, window_bounds = array<i64: 27, 64>}, {pipeline_mode = #tpu.pipeline_mode<synchronous>, transform_indices = @transform_2, window_bounds = array<i64: 1, 64>}, {pipeline_mode = #tpu.pipeline_mode<synchronous>, transform_indices = @transform_3, window_bounds = array<i64: 192, 192>}, {pipeline_mode = #tpu.pipeline_mode<synchronous>, transform_indices = @transform_4, window_bounds = array<i64: 1, 64>}, {pipeline_mode = #tpu.pipeline_mode<synchronous>, transform_indices = @transform_5, window_bounds = array<i64: 192, 384>}, {pipeline_mode = #tpu.pipeline_mode<synchronous>, transform_indices = @transform_6, window_bounds = array<i64: 1, 128>}, {transform_indices = @transform_7, window_bounds = array<i64: 1, 4, 8, 128>}]} {
    %c8_i32 = arith.constant 8 : i32
    %0 = arith.muli %arg1, %c8_i32 : i32
    %c0 = arith.constant 0 : index
    %c0_0 = arith.constant 0 : index
    %c0_1 = arith.constant 0 : index
    %c0_2 = arith.constant 0 : index
    %1 = vector.load %arg2[%c0, %c0_0, %c0_1, %c0_2] : memref<1x16x16x9xbf16, #tpu.memory_space<vmem>>, vector<1x16x16x9xbf16>
    %2 = vector.shape_cast %1 : vector<1x16x16x9xbf16> to vector<16x16x9xbf16>
    %3 = vector.extract_strided_slice %2 {offsets = [0, 0, 0], sizes = [14, 16, 9], strides = [1, 1, 1]} : vector<16x16x9xbf16> to vector<14x16x9xbf16>
    %4 = vector.extract_strided_slice %2 {offsets = [1, 0, 0], sizes = [14, 16, 9], strides = [1, 1, 1]} : vector<16x16x9xbf16> to vector<14x16x9xbf16>
    %5 = vector.extract_strided_slice %2 {offsets = [2, 0, 0], sizes = [14, 16, 9], strides = [1, 1, 1]} : vector<16x16x9xbf16> to vector<14x16x9xbf16>
    %6 = tpu.concatenate %3, %4, %5 in 2 : vector<14x16x9xbf16>, vector<14x16x9xbf16>, vector<14x16x9xbf16> -> vector<14x16x27xbf16>
    %7 = vector.shape_cast %6 : vector<14x16x27xbf16> to vector<224x27xbf16>
    %c0_3 = arith.constant 0 : index
    %c0_4 = arith.constant 0 : index
    %8 = vector.load %arg3[%c0_3, %c0_4] : memref<27x64xbf16, #tpu.memory_space<vmem>>, vector<27x64xbf16>
    %cst = arith.constant dense<0.000000e+00> : vector<224x64xf32>
    %9 = tpu.matmul %7, %8, %cst {dimension_numbers = #tpu.dot_dimension_numbers<[1], [0], [0], [1], [0, 0, 1, 1], [], []>} : vector<224x27xbf16>, vector<27x64xbf16>, vector<224x64xf32> -> vector<224x64xf32>
    %c0_5 = arith.constant 0 : index
    %c0_6 = arith.constant 0 : index
    %10 = vector.load %arg4[%c0_5, %c0_6] : memref<1x64xf32, #tpu.memory_space<vmem>>, vector<1x64xf32>
    %11 = vector.broadcast %10 : vector<1x64xf32> to vector<224x64xf32>
    %12 = arith.addf %9, %11 : vector<224x64xf32>
    %cst_7 = arith.constant 0.000000e+00 : f32
    %13 = vector.broadcast %cst_7 : f32 to vector<224x64xf32>
    %14 = arith.maximumf %12, %13 : vector<224x64xf32>
    %15 = vector.shape_cast %14 : vector<224x64xf32> to vector<14x16x64xf32>
    %c3_i32 = arith.constant 3 : i32
    %16 = arith.subi %0, %c3_i32 : i32
    %17 = tpu.iota {dimensions = array<i32: 0>} : vector<14x1x1xi32>
    %18 = vector.broadcast %16 : i32 to vector<14x1x1xi32>
    %19 = arith.addi %18, %17 : vector<14x1x1xi32>
    %c0_i32 = arith.constant 0 : i32
    %20 = vector.broadcast %c0_i32 : i32 to vector<14x1x1xi32>
    %21 = arith.cmpi sge, %19, %20 : vector<14x1x1xi32>
    %c16_i32 = arith.constant 16 : i32
    %22 = vector.broadcast %c16_i32 : i32 to vector<14x1x1xi32>
    %23 = arith.cmpi slt, %19, %22 : vector<14x1x1xi32>
    %24 = arith.andi %21, %23 : vector<14x1x1xi1>
    %cst_8 = arith.constant 0.000000e+00 : f32
    %25 = vector.shape_cast %24 : vector<14x1x1xi1> to vector<14x1x1xi1>
    %26 = vector.broadcast %25 : vector<14x1x1xi1> to vector<14x16x64xi1>
    %27 = vector.broadcast %cst_8 : f32 to vector<14x16x64xf32>
    %28 = arith.select %26, %15, %27 : vector<14x16x64xi1>, vector<14x16x64xf32>
    %29 = arith.truncf %28 : vector<14x16x64xf32> to vector<14x16x64xbf16>
    %cst_9 = arith.constant 0.000000e+00 : bf16
    %30 = vector.broadcast %cst_9 : bf16 to vector<14x1x64xbf16>
    %31 = tpu.concatenate %30, %29, %30 in 1 : vector<14x1x64xbf16>, vector<14x16x64xbf16>, vector<14x1x64xbf16> -> vector<14x18x64xbf16>
    %32 = vector.extract_strided_slice %31 {offsets = [0, 0, 0], sizes = [14, 16, 64], strides = [1, 1, 1]} : vector<14x18x64xbf16> to vector<14x16x64xbf16>
    %33 = vector.extract_strided_slice %31 {offsets = [0, 1, 0], sizes = [14, 16, 64], strides = [1, 1, 1]} : vector<14x18x64xbf16> to vector<14x16x64xbf16>
    %34 = vector.extract_strided_slice %31 {offsets = [0, 2, 0], sizes = [14, 16, 64], strides = [1, 1, 1]} : vector<14x18x64xbf16> to vector<14x16x64xbf16>
    %35 = tpu.concatenate %32, %33, %34 in 2 : vector<14x16x64xbf16>, vector<14x16x64xbf16>, vector<14x16x64xbf16> -> vector<14x16x192xbf16>
    %36 = vector.shape_cast %35 : vector<14x16x192xbf16> to vector<224x192xbf16>
    %c0_10 = arith.constant 0 : index
    %c0_11 = arith.constant 0 : index
    %37 = vector.load %arg5[%c0_10, %c0_11] : memref<192x192xbf16, #tpu.memory_space<vmem>>, vector<192x192xbf16>
    %cst_12 = arith.constant dense<0.000000e+00> : vector<224x192xf32>
    %38 = tpu.matmul %36, %37, %cst_12 {dimension_numbers = #tpu.dot_dimension_numbers<[1], [0], [0], [1], [0, 0, 1, 1], [], []>} : vector<224x192xbf16>, vector<192x192xbf16>, vector<224x192xf32> -> vector<224x192xf32>
    %39 = vector.shape_cast %38 : vector<224x192xf32> to vector<14x16x192xf32>
    %40 = vector.extract_strided_slice %39 {offsets = [0, 0, 0], sizes = [12, 16, 64], strides = [1, 1, 1]} : vector<14x16x192xf32> to vector<12x16x64xf32>
    %41 = vector.extract_strided_slice %39 {offsets = [1, 0, 64], sizes = [12, 16, 64], strides = [1, 1, 1]} : vector<14x16x192xf32> to vector<12x16x64xf32>
    %42 = arith.addf %40, %41 : vector<12x16x64xf32>
    %43 = vector.extract_strided_slice %39 {offsets = [2, 0, 128], sizes = [12, 16, 64], strides = [1, 1, 1]} : vector<14x16x192xf32> to vector<12x16x64xf32>
    %44 = arith.addf %42, %43 : vector<12x16x64xf32>
    %c0_13 = arith.constant 0 : index
    %c0_14 = arith.constant 0 : index
    %45 = vector.load %arg6[%c0_13, %c0_14] : memref<1x64xf32, #tpu.memory_space<vmem>>, vector<1x64xf32>
    %46 = vector.shape_cast %45 : vector<1x64xf32> to vector<1x1x64xf32>
    %47 = vector.broadcast %46 : vector<1x1x64xf32> to vector<12x16x64xf32>
    %48 = arith.addf %44, %47 : vector<12x16x64xf32>
    %cst_15 = arith.constant 0.000000e+00 : f32
    %49 = vector.broadcast %cst_15 : f32 to vector<12x16x64xf32>
    %50 = arith.maximumf %48, %49 : vector<12x16x64xf32>
    %51 = vector.shape_cast %50 : vector<12x16x64xf32> to vector<6x2x16x64xf32>
    %52 = vector.extract_strided_slice %51 {offsets = [0, 0, 0, 0], sizes = [6, 1, 16, 64], strides = [1, 1, 1, 1]} : vector<6x2x16x64xf32> to vector<6x1x16x64xf32>
    %53 = vector.shape_cast %52 : vector<6x1x16x64xf32> to vector<6x16x64xf32>
    %54 = vector.extract_strided_slice %51 {offsets = [0, 1, 0, 0], sizes = [6, 1, 16, 64], strides = [1, 1, 1, 1]} : vector<6x2x16x64xf32> to vector<6x1x16x64xf32>
    %55 = vector.shape_cast %54 : vector<6x1x16x64xf32> to vector<6x16x64xf32>
    %56 = arith.maximumf %53, %55 : vector<6x16x64xf32>
    %57 = vector.shape_cast %56 : vector<6x16x64xf32> to vector<6x8x2x64xf32>
    %58 = vector.extract_strided_slice %57 {offsets = [0, 0, 0, 0], sizes = [6, 8, 1, 64], strides = [1, 1, 1, 1]} : vector<6x8x2x64xf32> to vector<6x8x1x64xf32>
    %59 = vector.shape_cast %58 : vector<6x8x1x64xf32> to vector<6x8x64xf32>
    %60 = vector.extract_strided_slice %57 {offsets = [0, 0, 1, 0], sizes = [6, 8, 1, 64], strides = [1, 1, 1, 1]} : vector<6x8x2x64xf32> to vector<6x8x1x64xf32>
    %61 = vector.shape_cast %60 : vector<6x8x1x64xf32> to vector<6x8x64xf32>
    %62 = arith.maximumf %59, %61 : vector<6x8x64xf32>
    %c4_i32 = arith.constant 4 : i32
    %63 = arith.muli %arg1, %c4_i32 : i32
    %c1_i32 = arith.constant 1 : i32
    %64 = arith.subi %63, %c1_i32 : i32
    %65 = tpu.iota {dimensions = array<i32: 0>} : vector<6x1x1xi32>
    %66 = vector.broadcast %64 : i32 to vector<6x1x1xi32>
    %67 = arith.addi %66, %65 : vector<6x1x1xi32>
    %c0_i32_16 = arith.constant 0 : i32
    %68 = vector.broadcast %c0_i32_16 : i32 to vector<6x1x1xi32>
    %69 = arith.cmpi sge, %67, %68 : vector<6x1x1xi32>
    %c8_i32_17 = arith.constant 8 : i32
    %70 = vector.broadcast %c8_i32_17 : i32 to vector<6x1x1xi32>
    %71 = arith.cmpi slt, %67, %70 : vector<6x1x1xi32>
    %72 = arith.andi %69, %71 : vector<6x1x1xi1>
    %cst_18 = arith.constant 0.000000e+00 : f32
    %73 = vector.shape_cast %72 : vector<6x1x1xi1> to vector<6x1x1xi1>
    %74 = vector.broadcast %73 : vector<6x1x1xi1> to vector<6x8x64xi1>
    %75 = vector.broadcast %cst_18 : f32 to vector<6x8x64xf32>
    %76 = arith.select %74, %62, %75 : vector<6x8x64xi1>, vector<6x8x64xf32>
    %77 = arith.truncf %76 : vector<6x8x64xf32> to vector<6x8x64xbf16>
    %cst_19 = arith.constant 0.000000e+00 : bf16
    %78 = vector.broadcast %cst_19 : bf16 to vector<6x1x64xbf16>
    %79 = tpu.concatenate %78, %77, %78 in 1 : vector<6x1x64xbf16>, vector<6x8x64xbf16>, vector<6x1x64xbf16> -> vector<6x10x64xbf16>
    %80 = vector.extract_strided_slice %79 {offsets = [0, 0, 0], sizes = [6, 8, 64], strides = [1, 1, 1]} : vector<6x10x64xbf16> to vector<6x8x64xbf16>
    %81 = vector.extract_strided_slice %79 {offsets = [0, 1, 0], sizes = [6, 8, 64], strides = [1, 1, 1]} : vector<6x10x64xbf16> to vector<6x8x64xbf16>
    %82 = vector.extract_strided_slice %79 {offsets = [0, 2, 0], sizes = [6, 8, 64], strides = [1, 1, 1]} : vector<6x10x64xbf16> to vector<6x8x64xbf16>
    %83 = tpu.concatenate %80, %81, %82 in 2 : vector<6x8x64xbf16>, vector<6x8x64xbf16>, vector<6x8x64xbf16> -> vector<6x8x192xbf16>
    %84 = vector.shape_cast %83 : vector<6x8x192xbf16> to vector<48x192xbf16>
    %c0_20 = arith.constant 0 : index
    %c0_21 = arith.constant 0 : index
    %85 = vector.load %arg7[%c0_20, %c0_21] : memref<192x384xbf16, #tpu.memory_space<vmem>>, vector<192x384xbf16>
    %cst_22 = arith.constant dense<0.000000e+00> : vector<48x384xf32>
    %86 = tpu.matmul %84, %85, %cst_22 {dimension_numbers = #tpu.dot_dimension_numbers<[1], [0], [0], [1], [0, 0, 1, 1], [], []>} : vector<48x192xbf16>, vector<192x384xbf16>, vector<48x384xf32> -> vector<48x384xf32>
    %87 = vector.shape_cast %86 : vector<48x384xf32> to vector<6x8x384xf32>
    %88 = vector.extract_strided_slice %87 {offsets = [0, 0, 0], sizes = [4, 8, 128], strides = [1, 1, 1]} : vector<6x8x384xf32> to vector<4x8x128xf32>
    %89 = vector.extract_strided_slice %87 {offsets = [1, 0, 128], sizes = [4, 8, 128], strides = [1, 1, 1]} : vector<6x8x384xf32> to vector<4x8x128xf32>
    %90 = arith.addf %88, %89 : vector<4x8x128xf32>
    %91 = vector.extract_strided_slice %87 {offsets = [2, 0, 256], sizes = [4, 8, 128], strides = [1, 1, 1]} : vector<6x8x384xf32> to vector<4x8x128xf32>
    %92 = arith.addf %90, %91 : vector<4x8x128xf32>
    %c0_23 = arith.constant 0 : index
    %c0_24 = arith.constant 0 : index
    %93 = vector.load %arg8[%c0_23, %c0_24] : memref<1x128xf32, #tpu.memory_space<vmem>>, vector<1x128xf32>
    %94 = vector.shape_cast %93 : vector<1x128xf32> to vector<1x1x128xf32>
    %95 = vector.broadcast %94 : vector<1x1x128xf32> to vector<4x8x128xf32>
    %96 = arith.addf %92, %95 : vector<4x8x128xf32>
    %97 = vector.shape_cast %96 : vector<4x8x128xf32> to vector<1x4x8x128xf32>
    %98 = arith.truncf %97 : vector<1x4x8x128xf32> to vector<1x4x8x128xbf16>
    %c0_25 = arith.constant 0 : index
    %c0_26 = arith.constant 0 : index
    %c0_27 = arith.constant 0 : index
    %c0_28 = arith.constant 0 : index
    %99 = vector.load %arg9[%c0_25, %c0_26, %c0_27, %c0_28] : memref<1x4x8x128xbf16, #tpu.memory_space<vmem>>, vector<1x4x8x128xbf16>
    tpu.vector_store %arg9[%c0_25, %c0_26, %c0_27, %c0_28], %98 {strides = array<i32>} : memref<1x4x8x128xbf16, #tpu.memory_space<vmem>>, vector<1x4x8x128xbf16>,
    return
  }
  func.func @transform_0(%arg0: i32, %arg1: i32) -> (i32, i32, i32, i32) {
    %c2_i32 = arith.constant 2 : i32
    %0 = arith.muli %arg0, %c2_i32 : i32
    %1 = arith.addi %0, %arg1 : i32
    %c0_i32 = arith.constant 0 : i32
    %c0_i32_0 = arith.constant 0 : i32
    %c0_i32_1 = arith.constant 0 : i32
    %c0_i32_2 = arith.constant 0 : i32
    return %1, %c0_i32, %c0_i32_0, %c0_i32_1 : i32, i32, i32, i32
  }
  func.func @transform_1(%arg0: i32, %arg1: i32) -> (i32, i32) {
    %c0_i32 = arith.constant 0 : i32
    %c0_i32_0 = arith.constant 0 : i32
    %c0_i32_1 = arith.constant 0 : i32
    return %c0_i32, %c0_i32_0 : i32, i32
  }
  func.func @transform_2(%arg0: i32, %arg1: i32) -> (i32, i32) {
    %c0_i32 = arith.constant 0 : i32
    %c0_i32_0 = arith.constant 0 : i32
    %c0_i32_1 = arith.constant 0 : i32
    return %c0_i32, %c0_i32_0 : i32, i32
  }
  func.func @transform_3(%arg0: i32, %arg1: i32) -> (i32, i32) {
    %c0_i32 = arith.constant 0 : i32
    %c0_i32_0 = arith.constant 0 : i32
    %c0_i32_1 = arith.constant 0 : i32
    return %c0_i32, %c0_i32_0 : i32, i32
  }
  func.func @transform_4(%arg0: i32, %arg1: i32) -> (i32, i32) {
    %c0_i32 = arith.constant 0 : i32
    %c0_i32_0 = arith.constant 0 : i32
    %c0_i32_1 = arith.constant 0 : i32
    return %c0_i32, %c0_i32_0 : i32, i32
  }
  func.func @transform_5(%arg0: i32, %arg1: i32) -> (i32, i32) {
    %c0_i32 = arith.constant 0 : i32
    %c0_i32_0 = arith.constant 0 : i32
    %c0_i32_1 = arith.constant 0 : i32
    return %c0_i32, %c0_i32_0 : i32, i32
  }
  func.func @transform_6(%arg0: i32, %arg1: i32) -> (i32, i32) {
    %c0_i32 = arith.constant 0 : i32
    %c0_i32_0 = arith.constant 0 : i32
    %c0_i32_1 = arith.constant 0 : i32
    return %c0_i32, %c0_i32_0 : i32, i32
  }
  func.func @transform_7(%arg0: i32, %arg1: i32) -> (i32, i32, i32, i32) {
    %c0_i32 = arith.constant 0 : i32
    %c0_i32_0 = arith.constant 0 : i32
    %c0_i32_1 = arith.constant 0 : i32
    return %arg0, %arg1, %c0_i32, %c0_i32_0 : i32, i32, i32, i32
  }
}

</mosaic_0001>

<llo_original>
// kernel: feature_extractor.1
$region0: #{feature_extractor.1}
  #allocation0 [shape = 'u32[]', space=smem, size = 0x4, offset = 0x4, fixed_abs, tag = 'smem constant byte address 0x4 - core index']
  #allocation1 [shape = 'u32[72,128]{1,0:T(1,128)}', space=vmem, size = 0x9000, scoped, tag = 'internal scratch']
  %s0 = inlined_call_operand.vmem [shape: bf16[4,16,16,9], index: 0, kind: input, shape index: {}]
  %s1 = inlined_call_operand.vmem [shape: bf16[27,64], index: 1, kind: input, shape index: {}]
  %s2 = inlined_call_operand.vmem [shape: f32[1,64], index: 2, kind: input, shape index: {}]
  %s3 = inlined_call_operand.vmem [shape: bf16[192,192], index: 3, kind: input, shape index: {}]
  %s4 = inlined_call_operand.vmem [shape: f32[1,64], index: 4, kind: input, shape index: {}]
  %s5 = inlined_call_operand.vmem [shape: bf16[192,384], index: 5, kind: input, shape index: {}]
  %s6 = inlined_call_operand.vmem [shape: f32[1,128], index: 6, kind: input, shape index: {}]
  %s7 = inlined_call_operand.hbm [shape: bf16[2,8,8,128], index: 7, kind: output, shape index: {}]
  %s8 = sld [smem:[#allocation0]]
  $region61: #{feature_extractor.1} parent=0
    _
  %s10 = ssub.s32 1, %s8
  %s11 = scalar_select 0, %s10, %s8
  $region1: #{feature_extractor.1} parent=0
    #allocation2 [shape = 'u8[16384]{0}', space=vmem, size = 0x4000, scoped, tag = 'output window, operand 0']
    #allocation3 [shape = 's32[2]{0}', space=sflag, size = 0x8, scoped, tag = 'scoped memory for feature_extractor.1']
    %12 = vsyncpa [#allocation3], 0
    %s13 = scalar_lea.sflag [#allocation3], 1
    %14 = vsyncpa %s13, 0
    loop: start=0, step=1, limit=6
    $region2: #{feature_extractor.1} parent=1 // loop_pre_header
      _
    $region3: #{feature_extractor.1} parent=1 // loop_header
      %s16 = sphi 0, %s20
      %p17 = scmp.ge.s32.totalorder %s16, 6
      %s23 = sphi 0, %s35
      %s24 = sphi 0, %s31
      %s25 = sphi 0, %s23
      %s26 = sphi 0, %s24
      %s27 = sphi 0, %s25
      %s28 = sphi 0, %s26
      %s42 = sphi 0, %s44
      %s45 = sphi 0, %s42
      %s46 = sphi 0, %s45
      %s62 = sphi 0, %s46
      %s66 = sphi 0, %s66
      %s68 = sphi 0, %s66
      %s69 = sphi 0, %s68
      %s83 = sphi 0, %s69
      %s87 = sphi 0, %s87
      %s89 = sphi 0, %s87
      %s90 = sphi 0, %s89
      %s104 = sphi 0, %s90
      %s108 = sphi 0, %s108
      %s110 = sphi 0, %s108
      %s111 = sphi 0, %s110
      %s125 = sphi 0, %s111
      %s129 = sphi 0, %s129
      %s131 = sphi 0, %s129
      %s132 = sphi 0, %s131
      %s146 = sphi 0, %s132
      %s150 = sphi 0, %s150
      %s152 = sphi 0, %s150
      %s153 = sphi 0, %s152
      %s167 = sphi 0, %s153
      %s171 = sphi 0, %s171
      %s173 = sphi 0, %s171
      %s174 = sphi 0, %s173
      %s188 = sphi 0, %s174
      %s196 = sphi 0, %s198
      %s199 = sphi 0, %s196
      %s200 = sphi 0, %s199
      %s216 = sphi 0, %s200
    $region4: #{feature_extractor.1} parent=1 // loop_header_branch
      %19 = sbr.rel (%p17) target = $region8
    $region5: #{feature_extractor.1} parent=1 // loop_body
      %s21 = ssub.s32 %s16, 1
      %s22 = ssub.s32 %s16, 2
      %s29 = sadd.s32 1, %s24
      %p30 = scmp.ge.s32.totalorder %s29, 2
      %s31 = scalar_select %p30, 0, %s29
      %s32 = sadd.s32 1, %s23
      %s33 = scalar_select %p30, %s32, %s23
      %p34 = scmp.ge.s32.totalorder %s33, 2
      %s35 = scalar_select %p34, 0, %s33
      %s36 = smul.u32 %s23, 2
      %s37 = sadd.s32 %s36, %s24
      %s38 = smul.u32 %s35, 2
      %s39 = sadd.s32 %s38, %s31
      %s40 = ssub.s32 %s37, %s39
      %p41 = scmp.eq.s32.totalorder %s40, 0
      %s43 = sadd.s32 %s42, 1
      %s44 = scalar_select %p41, %s42, %s43
      %p47 = pneg %p41
      %p48 = scmp.eq.s32.totalorder %s16, 3
      %p49 = por %p47, %p48
      %p50 = scmp.ne.s32.totalorder %s42, %s45
      %p51 = scmp.eq.s32.totalorder %s16, 0
      %p52 = por %p50, %p51
      %p53 = scmp.ne.s32.totalorder %s42, %s45
      %p54 = scmp.eq.s32.totalorder %s21, 3
      %p55 = por %p53, %p54
      %p56 = scmp.ne.s32.totalorder %s45, %s46
      %p57 = scmp.eq.s32.totalorder %s21, 0
      %p58 = por %p56, %p57
      %p59 = scmp.ne.s32.totalorder %s45, %s46
      %p60 = scmp.eq.s32.totalorder %s22, 3
      %p61 = por %p59, %p60
      %p63 = scmp.ne.s32.totalorder %s46, %s62
      %p64 = scmp.eq.s32.totalorder %s22, 0
      %p65 = por %p63, %p64
      %s67 = sadd.s32 %s66, 1
      %p70 = scmp.eq.s32.totalorder %s16, 3
      %p71 = scmp.ne.s32.totalorder %s66, %s68
      %p72 = scmp.eq.s32.totalorder %s16, 0
      %p73 = por %p71, %p72
      %p74 = scmp.ne.s32.totalorder %s66, %s68
      %p75 = scmp.eq.s32.totalorder %s21, 3
      %p76 = por %p74, %p75
      %p77 = scmp.ne.s32.totalorder %s68, %s69
      %p78 = scmp.eq.s32.totalorder %s21, 0
      %p79 = por %p77, %p78
      %p80 = scmp.ne.s32.totalorder %s68, %s69
      %p81 = scmp.eq.s32.totalorder %s22, 3
      %p82 = por %p80, %p81
      %p84 = scmp.ne.s32.totalorder %s69, %s83
      %p85 = scmp.eq.s32.totalorder %s22, 0
      %p86 = por %p84, %p85
      %s88 = sadd.s32 %s87, 1
      %p91 = scmp.eq.s32.totalorder %s16, 3
      %p92 = scmp.ne.s32.totalorder %s87, %s89
      %p93 = scmp.eq.s32.totalorder %s16, 0
      %p94 = por %p92, %p93
      %p95 = scmp.ne.s32.totalorder %s87, %s89
      %p96 = scmp.eq.s32.totalorder %s21, 3
      %p97 = por %p95, %p96
      %p98 = scmp.ne.s32.totalorder %s89, %s90
      %p99 = scmp.eq.s32.totalorder %s21, 0
      %p100 = por %p98, %p99
      %p101 = scmp.ne.s32.totalorder %s89, %s90
      %p102 = scmp.eq.s32.totalorder %s22, 3
      %p103 = por %p101, %p102
      %p105 = scmp.ne.s32.totalorder %s90, %s104
      %p106 = scmp.eq.s32.totalorder %s22, 0
      %p107 = por %p105, %p106
      %s109 = sadd.s32 %s108, 1
      %p112 = scmp.eq.s32.totalorder %s16, 3
      %p113 = scmp.ne.s32.totalorder %s108, %s110
      %p114 = scmp.eq.s32.totalorder %s16, 0
      %p115 = por %p113, %p114
      %p116 = scmp.ne.s32.totalorder %s108, %s110
      %p117 = scmp.eq.s32.totalorder %s21, 3
      %p118 = por %p116, %p117
      %p119 = scmp.ne.s32.totalorder %s110, %s111
      %p120 = scmp.eq.s32.totalorder %s21, 0
      %p121 = por %p119, %p120
      %p122 = scmp.ne.s32.totalorder %s110, %s111
      %p123 = scmp.eq.s32.totalorder %s22, 3
      %p124 = por %p122, %p123
      %p126 = scmp.ne.s32.totalorder %s111, %s125
      %p127 = scmp.eq.s32.totalorder %s22, 0
      %p128 = por %p126, %p127
      %s130 = sadd.s32 %s129, 1
      %p133 = scmp.eq.s32.totalorder %s16, 3
      %p134 = scmp.ne.s32.totalorder %s129, %s131
      %p135 = scmp.eq.s32.totalorder %s16, 0
      %p136 = por %p134, %p135
      %p137 = scmp.ne.s32.totalorder %s129, %s131
      %p138 = scmp.eq.s32.totalorder %s21, 3
      %p139 = por %p137, %p138
      %p140 = scmp.ne.s32.totalorder %s131, %s132
      %p141 = scmp.eq.s32.totalorder %s21, 0
      %p142 = por %p140, %p141
      %p143 = scmp.ne.s32.totalorder %s131, %s132
      %p144 = scmp.eq.s32.totalorder %s22, 3
      %p145 = por %p143, %p144
      %p147 = scmp.ne.s32.totalorder %s132, %s146
      %p148 = scmp.eq.s32.totalorder %s22, 0
      %p149 = por %p147, %p148
      %s151 = sadd.s32 %s150, 1
      %p154 = scmp.eq.s32.totalorder %s16, 3
      %p155 = scmp.ne.s32.totalorder %s150, %s152
      %p156 = scmp.eq.s32.totalorder %s16, 0
      %p157 = por %p155, %p156
      %p158 = scmp.ne.s32.totalorder %s150, %s152
      %p159 = scmp.eq.s32.totalorder %s21, 3
      %p160 = por %p158, %p159
      %p161 = scmp.ne.s32.totalorder %s152, %s153
      %p162 = scmp.eq.s32.totalorder %s21, 0
      %p163 = por %p161, %p162
      %p164 = scmp.ne.s32.totalorder %s152, %s153
      %p165 = scmp.eq.s32.totalorder %s22, 3
      %p166 = por %p164, %p165
      %p168 = scmp.ne.s32.totalorder %s153, %s167
      %p169 = scmp.eq.s32.totalorder %s22, 0
      %p170 = por %p168, %p169
      %s172 = sadd.s32 %s171, 1
      %p175 = scmp.eq.s32.totalorder %s16, 3
      %p176 = scmp.ne.s32.totalorder %s171, %s173
      %p177 = scmp.eq.s32.totalorder %s16, 0
      %p178 = por %p176, %p177
      %p179 = scmp.ne.s32.totalorder %s171, %s173
      %p180 = scmp.eq.s32.totalorder %s21, 3
      %p181 = por %p179, %p180
      %p182 = scmp.ne.s32.totalorder %s173, %s174
      %p183 = scmp.eq.s32.totalorder %s21, 0
      %p184 = por %p182, %p183
      %p185 = scmp.ne.s32.totalorder %s173, %s174
      %p186 = scmp.eq.s32.totalorder %s22, 3
      %p187 = por %p185, %p186
      %p189 = scmp.ne.s32.totalorder %s174, %s188
      %p190 = scmp.eq.s32.totalorder %s22, 0
      %p191 = por %p189, %p190
      %s192 = ssub.s32 %s23, %s35
      %s193 = ssub.s32 %s24, %s31
      %s194 = sor.u32 %s192, %s193
      %p195 = scmp.eq.s32.totalorder %s194, 0
      %s197 = sadd.s32 %s196, 1
      %s198 = scalar_select %p195, %s196, %s197
      %p201 = pneg %p195
      %p202 = scmp.eq.s32.totalorder %s16, 3
      %p203 = por %p201, %p202
      %p204 = scmp.ne.s32.totalorder %s196, %s199
      %p205 = scmp.eq.s32.totalorder %s16, 0
      %p206 = por %p204, %p205
      %p207 = scmp.ne.s32.totalorder %s196, %s199
      %p208 = scmp.eq.s32.totalorder %s21, 3
      %p209 = por %p207, %p208
      %p210 = scmp.ne.s32.totalorder %s199, %s200
      %p211 = scmp.eq.s32.totalorder %s21, 0
      %p212 = por %p210, %p211
      %p213 = scmp.ne.s32.totalorder %s199, %s200
      %p214 = scmp.eq.s32.totalorder %s22, 3
      %p215 = por %p213, %p214
      %p217 = scmp.ne.s32.totalorder %s200, %s216
      %p218 = scmp.eq.s32.totalorder %s22, 0
      %p219 = por %p217, %p218
      %p220 = scmp.le.s32.totalorder 1, %s16
      %p221 = scmp.lt.s32.totalorder %s16, 5
      %p222 = pnand %p220, %p221
      %p223 = pneg %p222
      // Predicated region
      $region9: #{feature_extractor.1} parent=5 // pred_check
        _
      $region10: #{feature_extractor.1} parent=5 // pred_check_branch
        %225 = sbr.rel (%p222) target = $region12
      $region11: #{feature_extractor.1} parent=5 // pred_region
        %s226 = ssub.s32 %s16, 1
        // Predicated region
        $region13: #{feature_extractor.1} parent=11 // pred_check
          %p227 = pneg %p79
        $region14: #{feature_extractor.1} parent=11 // pred_check_branch
          %229 = sbr.rel (%p227) target = $region16
        $region15: #{feature_extractor.1} parent=11 // pred_region
          _
        $region16: #{feature_extractor.1} parent=11 // pred_fallthru
          _
        // Predicated region
        $region17: #{feature_extractor.1} parent=11 // pred_check
          %p230 = pneg %p100
        $region18: #{feature_extractor.1} parent=11 // pred_check_branch
          %232 = sbr.rel (%p230) target = $region20
        $region19: #{feature_extractor.1} parent=11 // pred_region
          _
        $region20: #{feature_extractor.1} parent=11 // pred_fallthru
          _
        // Predicated region
        $region21: #{feature_extractor.1} parent=11 // pred_check
          %p233 = pneg %p121
        $region22: #{feature_extractor.1} parent=11 // pred_check_branch
          %235 = sbr.rel (%p233) target = $region24
        $region23: #{feature_extractor.1} parent=11 // pred_region
          _
        $region24: #{feature_extractor.1} parent=11 // pred_fallthru
          _
        // Predicated region
        $region25: #{feature_extractor.1} parent=11 // pred_check
          %p236 = pneg %p142
        $region26: #{feature_extractor.1} parent=11 // pred_check_branch
          %238 = sbr.rel (%p236) target = $region28
        $region27: #{feature_extractor.1} parent=11 // pred_region
          _
        $region28: #{feature_extractor.1} parent=11 // pred_fallthru
          _
        // Predicated region
        $region29: #{feature_extractor.1} parent=11 // pred_check
          %p239 = pneg %p163
        $region30: #{feature_extractor.1} parent=11 // pred_check_branch
          %241 = sbr.rel (%p239) target = $region32
        $region31: #{feature_extractor.1} parent=11 // pred_region
          _
        $region32: #{feature_extractor.1} parent=11 // pred_fallthru
          _
        // Predicated region
        $region33: #{feature_extractor.1} parent=11 // pred_check
          %p242 = pneg %p184
        $region34: #{feature_extractor.1} parent=11 // pred_check_branch
          %244 = sbr.rel (%p242) target = $region36
        $region35: #{feature_extractor.1} parent=11 // pred_region
          _
        $region36: #{feature_extractor.1} parent=11 // pred_fallthru
          _
      $region12: #{feature_extractor.1} parent=5 // pred_fallthru
        _
      %p245 = scmp.lt.s32.totalorder %s16, 4
      // Predicated region
      $region37: #{feature_extractor.1} parent=5 // pred_check
        %p246 = pneg %p245
      $region38: #{feature_extractor.1} parent=5 // pred_check_branch
        %248 = sbr.rel (%p246) target = $region40
      $region39: #{feature_extractor.1} parent=5 // pred_region
        // Predicated region
        $region41: #{feature_extractor.1} parent=39 // pred_check
          %p249 = pneg %p52
        $region42: #{feature_extractor.1} parent=39 // pred_check_branch
          %251 = sbr.rel (%p249) target = $region44
        $region43: #{feature_extractor.1} parent=39 // pred_region
          %s252 = smul.u32 %s23, 2
          %s253 = sadd.s32 %s252, %s24
          %p254 = scmp.lt.s32.totalorder %s253, 3
          %s255 = scalar_select %p254, %s253, 3
          %s256 = smul.addr %s255, 32
          %s257 = smul.addr %s256, 4
          %s258 = scalar_lea.vmem %s0, %s257
          %s259 = smul.u32 %s23, 2
          %s260 = sadd.s32 %s259, %s24
        $region44: #{feature_extractor.1} parent=39 // pred_fallthru
          _
      $region40: #{feature_extractor.1} parent=5 // pred_fallthru
        _
      %p261 = scmp.le.s32.totalorder 1, %s16
      %p262 = scmp.lt.s32.totalorder %s16, 5
      %p263 = pnand %p261, %p262
      %p264 = pneg %p263
      // Predicated region
      $region45: #{feature_extractor.1} parent=5 // pred_check
        _
      $region46: #{feature_extractor.1} parent=5 // pred_check_branch
        %266 = sbr.rel (%p263) target = $region48
      $region47: #{feature_extractor.1} parent=5 // pred_region
        %s267 = ssub.s32 %s16, 1
        %s268 = smul.u32 %s25, 2
        %s269 = sadd.s32 %s268, %s26
        %p270 = scmp.lt.s32.totalorder %s269, 3
        %s271 = scalar_select %p270, %s269, 3
        %s272 = smul.addr %s271, 32
        %s273 = smul.addr %s272, 4
        %s274 = scalar_lea.vmem %s0, %s273
        %p275 = pneg %p58
        %p276 = pneg %p55
        %p277 = pneg %p79
        %p278 = pneg %p76
        %p279 = pneg %p100
        %p280 = pneg %p97
        %p281 = pneg %p121
        %p282 = pneg %p118
        %p283 = pneg %p142
        %p284 = pneg %p139
        %p285 = pneg %p163
        %p286 = pneg %p160
        %p287 = pneg %p184
        %p288 = pneg %p181
        %p289 = pneg %p212
        %p290 = pneg %p209
        %s291 = sand.u32 %s199, 1
        %s292 = scalar_lea.sflag [#allocation3], %s291
        %s293 = sand.u32 %s199, 1
        %s294 = smul.addr %s293, 16
        %s295 = scalar_lea.vmem [#allocation2], %s294
        %s296 = smul.u32 %s25, 2
        %s297 = sadd.s32 %s296, %s26
        %p298 = scmp.lt.s32.totalorder %s297, 3
        %s299 = scalar_select %p298, %s297, 3
        %s300 = smul.addr %s299, 32
        %s301 = smul.addr %s300, 4
        %s302 = scalar_lea.vmem %s0, %s301
        %s303 = smul.u32 %s25, 2
        %s304 = sadd.s32 %s303, %s26
        %s305 = smul.u32 4, %s26
        %s307 = smul.u32 %s26, 8
        %v308 = vld [vmem:[%s302] sm:$0xf]
        %v309 = vld [vmem:[%s302 + $0x4] sm:$0xf]
        %v310 = vld [vmem:[%s302 + $0x8] sm:$0xf]
        %v311 = vld [vmem:[%s302 + $0xc] sm:$0xf]
        %v312 = vld [vmem:[%s302 + $0x10] sm:$0xf]
        %v313 = vld [vmem:[%s302 + $0x14] sm:$0xf]
        %v314 = vld [vmem:[%s302 + $0x18] sm:$0xf]
        %v315 = vld [vmem:[%s302 + $0x1c] sm:$0xf]
        %v316 = vld [vmem:[%s302 + $0x20] sm:$0xf]
        %v317 = vld [vmem:[%s302 + $0x24] sm:$0xf]
        %v318 = vld [vmem:[%s302 + $0x28] sm:$0xf]
        %v319 = vld [vmem:[%s302 + $0x2c] sm:$0xf]
        %v320 = vld [vmem:[%s302 + $0x30] sm:$0xf]
        %v321 = vld [vmem:[%s302 + $0x34] sm:$0xf]
        %v322 = vld [vmem:[%s302 + $0x38] sm:$0xf]
        %v323 = vld [vmem:[%s302 + $0x3c] sm:$0xf]
        %v324 = vld [vmem:[%s302 + $0x40] sm:$0xf]
        %v325 = vld [vmem:[%s302 + $0x44] sm:$0xf]
        %v326 = vld [vmem:[%s302 + $0x48] sm:$0xf]
        %v327 = vld [vmem:[%s302 + $0x4c] sm:$0xf]
        %v328 = vld [vmem:[%s302 + $0x50] sm:$0xf]
        %v329 = vld [vmem:[%s302 + $0x54] sm:$0xf]
        %v330 = vld [vmem:[%s302 + $0x58] sm:$0xf]
        %v331 = vld [vmem:[%s302 + $0x5c] sm:$0xf]
        %v332 = vld [vmem:[%s302 + $0x60] sm:$0xf]
        %v333 = vld [vmem:[%s302 + $0x64] sm:$0xf]
        %v334 = vld [vmem:[%s302 + $0x68] sm:$0xf]
        %v335 = vld [vmem:[%s302 + $0x6c] sm:$0xf]
        %v336 = vld [vmem:[%s302 + $0x70] sm:$0xf]
        %v337 = vld [vmem:[%s302 + $0x74] sm:$0xf]
        %v338 = vld [vmem:[%s302 + $0x78] sm:$0xf]
        %v339 = vld [vmem:[%s302 + $0x7c] sm:$0xf]
        %v368 = vunpack.c.l.b16 %v308
        %v369 = vunpack.c.l.b16 %v309
        %v370 = vunpack.c.l.b16 %v310
        %v371 = vunpack.c.l.b16 %v311
        %v372 = vunpack.c.l.b16 %v312
        %v373 = vunpack.c.l.b16 %v313
        %v374 = vunpack.c.l.b16 %v314
        %v375 = vunpack.c.l.b16 %v315
        %v376 = vunpack.c.l.b16 %v316
        %v377 = vunpack.c.l.b16 %v317
        %v378 = vunpack.c.l.b16 %v318
        %v379 = vunpack.c.l.b16 %v319
        %v380 = vunpack.c.l.b16 %v320
        %v381 = vunpack.c.l.b16 %v321
        %v382 = vunpack.c.l.b16 %v322
        %v383 = vunpack.c.l.b16 %v323
        %v384 = vunpack.c.l.b16 %v324
        %v385 = vunpack.c.l.b16 %v325
        %v386 = vunpack.c.l.b16 %v326
        %v387 = vunpack.c.l.b16 %v327
        %v388 = vunpack.c.l.b16 %v328
        %v389 = vunpack.c.l.b16 %v329
        %v390 = vunpack.c.l.b16 %v330
        %v391 = vunpack.c.l.b16 %v331
        %v392 = vunpack.c.l.b16 %v332
        %v393 = vunpack.c.l.b16 %v333
        %v394 = vunpack.c.l.b16 %v334
        %v395 = vunpack.c.l.b16 %v335
        %v396 = vpack.c.b16 %v369, %v368
        %v397 = vpack.c.b16 %v371, %v370
        %v398 = vpack.c.b16 %v373, %v372
        %v399 = vpack.c.b16 %v375, %v374
        %v400 = vpack.c.b16 %v377, %v376
        %v401 = vpack.c.b16 %v379, %v378
        %v402 = vpack.c.b16 %v381, %v380
        %v403 = vpack.c.b16 %v383, %v382
        %v404 = vpack.c.b16 %v385, %v384
        %v405 = vpack.c.b16 %v387, %v386
        %v406 = vpack.c.b16 %v389, %v388
        %v407 = vpack.c.b16 %v391, %v390
        %v408 = vpack.c.b16 %v393, %v392
        %v409 = vpack.c.b16 %v395, %v394
        %v412 = vunpack.c.l.b16 %v336
        %v413 = vunpack.c.l.b16 %v337
        %v414 = vpack.c.b16 %v413, %v412
        %415 = vrot.lane.b32.xlu0 %v397, 9
        %v416 = vpop.permute.xlu0 %415
        %417 = vrot.lane.b32.xlu0 %v398, 9
        %v418 = vpop.permute.xlu0 %417
        %419 = vrot.lane.b32.xlu0 %v399, 9
        %v420 = vpop.permute.xlu0 %419
        %421 = vrot.lane.b32.xlu0 %v400, 9
        %v422 = vpop.permute.xlu0 %421
        %423 = vrot.lane.b32.xlu0 %v401, 9
        %v424 = vpop.permute.xlu0 %423
        %425 = vrot.lane.b32.xlu0 %v402, 9
        %v426 = vpop.permute.xlu0 %425
        %427 = vrot.lane.b32.xlu0 %v403, 9
        %v428 = vpop.permute.xlu0 %427
        %429 = vrot.lane.b32.xlu0 %v404, 9
        %v430 = vpop.permute.xlu0 %429
        %431 = vrot.lane.b32.xlu0 %v405, 9
        %v432 = vpop.permute.xlu0 %431
        %433 = vrot.lane.b32.xlu0 %v406, 9
        %v434 = vpop.permute.xlu0 %433
        %435 = vrot.lane.b32.xlu0 %v407, 9
        %v436 = vpop.permute.xlu0 %435
        %437 = vrot.lane.b32.xlu0 %v408, 9
        %v438 = vpop.permute.xlu0 %437
        %439 = vrot.lane.b32.xlu0 %v409, 9
        %v440 = vpop.permute.xlu0 %439
        %441 = vrot.lane.b32.xlu0 %v414, 9
        %v442 = vpop.permute.xlu0 %441
        %v445 = vunpack.c.l.b16 %v338
        %v446 = vunpack.c.l.b16 %v339
        %v447 = vpack.c.b16 %v446, %v445
        %448 = vrot.lane.b32.xlu0 %v398, 18
        %v449 = vpop.permute.xlu0 %448
        %450 = vrot.lane.b32.xlu0 %v399, 18
        %v451 = vpop.permute.xlu0 %450
        %452 = vrot.lane.b32.xlu0 %v400, 18
        %v453 = vpop.permute.xlu0 %452
        %454 = vrot.lane.b32.xlu0 %v401, 18
        %v455 = vpop.permute.xlu0 %454
        %456 = vrot.lane.b32.xlu0 %v402, 18
        %v457 = vpop.permute.xlu0 %456
        %458 = vrot.lane.b32.xlu0 %v403, 18
        %v459 = vpop.permute.xlu0 %458
        %460 = vrot.lane.b32.xlu0 %v404, 18
        %v461 = vpop.permute.xlu0 %460
        %462 = vrot.lane.b32.xlu0 %v405, 18
        %v463 = vpop.permute.xlu0 %462
        %464 = vrot.lane.b32.xlu0 %v406, 18
        %v465 = vpop.permute.xlu0 %464
        %466 = vrot.lane.b32.xlu0 %v407, 18
        %v467 = vpop.permute.xlu0 %466
        %468 = vrot.lane.b32.xlu0 %v408, 18
        %v469 = vpop.permute.xlu0 %468
        %470 = vrot.lane.b32.xlu0 %v409, 18
        %v471 = vpop.permute.xlu0 %470
        %472 = vrot.lane.b32.xlu0 %v414, 18
        %v473 = vpop.permute.xlu0 %472
        %474 = vrot.lane.b32.xlu0 %v447, 18
        %v475 = vpop.permute.xlu0 %474
        %vm476 = vcmask 72704
        %v479 = vsel %vm476, %v396, %v416
        %v482 = vsel %vm476, %v397, %v418
        %v485 = vsel %vm476, %v398, %v420
        %v488 = vsel %vm476, %v399, %v422
        %v491 = vsel %vm476, %v400, %v424
        %v494 = vsel %vm476, %v401, %v426
        %v497 = vsel %vm476, %v402, %v428
        %v500 = vsel %vm476, %v403, %v430
        %v503 = vsel %vm476, %v404, %v432
        %v506 = vsel %vm476, %v405, %v434
        %v509 = vsel %vm476, %v406, %v436
        %v512 = vsel %vm476, %v407, %v438
        %v515 = vsel %vm476, %v408, %v440
        %v518 = vsel %vm476, %v409, %v442
        %vm519 = vcmask 146432
        %v521 = vsel %vm519, %v479, %v449
        %v523 = vsel %vm519, %v482, %v451
        %v525 = vsel %vm519, %v485, %v453
        %v527 = vsel %vm519, %v488, %v455
        %v529 = vsel %vm519, %v491, %v457
        %v531 = vsel %vm519, %v494, %v459
        %v533 = vsel %vm519, %v497, %v461
        %v535 = vsel %vm519, %v500, %v463
        %v537 = vsel %vm519, %v503, %v465
        %v539 = vsel %vm519, %v506, %v467
        %v541 = vsel %vm519, %v509, %v469
        %v543 = vsel %vm519, %v512, %v471
        %v545 = vsel %vm519, %v515, %v473
        %v547 = vsel %vm519, %v518, %v475
        %v548 = vld [vmem:[%s1] sm:$0xf]
        %v549 = vld [vmem:[%s1 + $0x4] sm:$0xf]
        %v550 = vld [vmem:[%s1 + $0x8] sm:$0xf]
        %v551 = vld [vmem:[%s1 + $0xc] sm:$0x3]
        %v552 = vld [vmem:[%s2] sm:$0x1]
        %v554 = vperm.slane %v552, 0
        %v560 = vunpack.c.l.b16 %v548
        %v561 = vunpack.c.l.b16 %v549
        %v562 = vunpack.c.l.b16 %v550
        %v563 = vunpack.c.l.b16 %v551
        %v564 = vpack.c.b16 %v561, %v560
        %v565 = vpack.c.b16 %v563, %v562
        %vm567 = vcmask 220160
        %v568 = vsel %vm567, %v521, 0
        %v570 = vsel %vm567, %v523, 0
        %v572 = vsel %vm567, %v525, 0
        %v574 = vsel %vm567, %v527, 0
        %v576 = vsel %vm567, %v529, 0
        %v578 = vsel %vm567, %v531, 0
        %v580 = vsel %vm567, %v533, 0
        %v582 = vsel %vm567, %v535, 0
        %v584 = vsel %vm567, %v537, 0
        %v586 = vsel %vm567, %v539, 0
        %v588 = vsel %vm567, %v541, 0
        %v590 = vsel %vm567, %v543, 0
        %v592 = vsel %vm567, %v545, 0
        %v594 = vsel %vm567, %v547, 0
        %vm596 = vcmask 1044480
        %vm597 = vcmask 1045504
        %v598 = vsel %vm596, 4294967295, 65535
        %v599 = vsel %vm597, %v598, 0
        %v601 = vand.u32 %v565, %v599
        %603 = vmatpush.bf16.msra.mxu0 0
        %604 = vmatpush.bf16.msra.mxu0 0
        %605 = vmatpush.bf16.msra.mxu0 0
        %606 = vmatpush.bf16.msra.mxu0 0
        %607 = vmatpush.bf16.msra.mxu0 0
        %608 = vmatpush.bf16.msra.mxu0 0
        %609 = vmatpush.bf16.msra.mxu0 %v601
        %610 = vmatpush.bf16.msra.mxu0 %v564
        %611 = vmatmul.bf16.gmra.mxu0 %v568
        %v612 = vpop.f32.mrf.mxu0
        %v613 = vadd.f32 %v554, %v612
        %v614 = vpop.f32.mrf.mxu0
        %v615 = vadd.f32 %v554, %v614
        %616 = vmatmul.bf16.gmra.mxu0 %v570
        %v617 = vpop.f32.mrf.mxu0
        %v618 = vadd.f32 %v554, %v617
        %v619 = vpop.f32.mrf.mxu0
        %v620 = vadd.f32 %v554, %v619
        %621 = vmatmul.bf16.gmra.mxu0 %v572
        %v622 = vpop.f32.mrf.mxu0
        %v623 = vadd.f32 %v554, %v622
        %v624 = vpop.f32.mrf.mxu0
        %v625 = vadd.f32 %v554, %v624
        %626 = vmatmul.bf16.gmra.mxu0 %v574
        %v627 = vpop.f32.mrf.mxu0
        %v628 = vadd.f32 %v554, %v627
        %v629 = vpop.f32.mrf.mxu0
        %v630 = vadd.f32 %v554, %v629
        %631 = vmatmul.bf16.gmra.mxu0 %v576
        %v632 = vpop.f32.mrf.mxu0
        %v633 = vadd.f32 %v554, %v632
        %v634 = vpop.f32.mrf.mxu0
        %v635 = vadd.f32 %v554, %v634
        %636 = vmatmul.bf16.gmra.mxu0 %v578
        %v637 = vpop.f32.mrf.mxu0
        %v638 = vadd.f32 %v554, %v637
        %v639 = vpop.f32.mrf.mxu0
        %v640 = vadd.f32 %v554, %v639
        %641 = vmatmul.bf16.gmra.mxu0 %v580
        %v642 = vpop.f32.mrf.mxu0
        %v643 = vadd.f32 %v554, %v642
        %v644 = vpop.f32.mrf.mxu0
        %v645 = vadd.f32 %v554, %v644
        %646 = vmatmul.bf16.gmra.mxu0 %v582
        %v647 = vpop.f32.mrf.mxu0
        %v648 = vadd.f32 %v554, %v647
        %v649 = vpop.f32.mrf.mxu0
        %v650 = vadd.f32 %v554, %v649
        %651 = vmatmul.bf16.gmra.mxu0 %v584
        %v652 = vpop.f32.mrf.mxu0
        %v653 = vadd.f32 %v554, %v652
        %v654 = vpop.f32.mrf.mxu0
        %v655 = vadd.f32 %v554, %v654
        %656 = vmatmul.bf16.gmra.mxu0 %v586
        %v657 = vpop.f32.mrf.mxu0
        %v658 = vadd.f32 %v554, %v657
        %v659 = vpop.f32.mrf.mxu0
        %v660 = vadd.f32 %v554, %v659
        %661 = vmatmul.bf16.gmra.mxu0 %v588
        %v662 = vpop.f32.mrf.mxu0
        %v663 = vadd.f32 %v554, %v662
        %v664 = vpop.f32.mrf.mxu0
        %v665 = vadd.f32 %v554, %v664
        %666 = vmatmul.bf16.gmra.mxu0 %v590
        %v667 = vpop.f32.mrf.mxu0
        %v668 = vadd.f32 %v554, %v667
        %v669 = vpop.f32.mrf.mxu0
        %v670 = vadd.f32 %v554, %v669
        %671 = vmatmul.bf16.gmra.mxu0 %v592
        %v672 = vpop.f32.mrf.mxu0
        %v673 = vadd.f32 %v554, %v672
        %v674 = vpop.f32.mrf.mxu0
        %v675 = vadd.f32 %v554, %v674
        %676 = vmatmul.bf16.gmra.mxu0 %v594
        %v677 = vpop.f32.mrf.mxu0
        %v678 = vadd.f32 %v554, %v677
        %v679 = vpop.f32.mrf.mxu0
        %v680 = vadd.f32 %v554, %v679
        %681 = vdwg.mxu0
        %v682 = vmax.f32 %v613, 0.0
        %v683 = vmax.f32 %v615, 0.0
        %v684 = vmax.f32 %v618, 0.0
        %v685 = vmax.f32 %v620, 0.0
        %v686 = vmax.f32 %v623, 0.0
        %v687 = vmax.f32 %v625, 0.0
        %v688 = vmax.f32 %v628, 0.0
        %v689 = vmax.f32 %v630, 0.0
        %v690 = vmax.f32 %v633, 0.0
        %v691 = vmax.f32 %v635, 0.0
        %v692 = vmax.f32 %v638, 0.0
        %v693 = vmax.f32 %v640, 0.0
        %v694 = vmax.f32 %v643, 0.0
        %v695 = vmax.f32 %v645, 0.0
        %v696 = vmax.f32 %v648, 0.0
        %v697 = vmax.f32 %v650, 0.0
        %v698 = vmax.f32 %v653, 0.0
        %v699 = vmax.f32 %v655, 0.0
        %v700 = vmax.f32 %v658, 0.0
        %v701 = vmax.f32 %v660, 0.0
        %v702 = vmax.f32 %v663, 0.0
        %v703 = vmax.f32 %v665, 0.0
        %v704 = vmax.f32 %v668, 0.0
        %v705 = vmax.f32 %v670, 0.0
        %v706 = vmax.f32 %v673, 0.0
        %v707 = vmax.f32 %v675, 0.0
        %v708 = vmax.f32 %v678, 0.0
        %v709 = vmax.f32 %v680, 0.0
        %s710 = ssub.s32 %s307, 3
        %v711 = vstv %s710
        %v712 = vadd.s32 %v711, 1
        %v713 = vadd.s32 %v711, 2
        %v714 = vadd.s32 %v711, 3
        %v715 = vadd.s32 %v711, 4
        %v716 = vadd.s32 %v711, 5
        %v717 = vadd.s32 %v711, 6
        %v718 = vadd.s32 %v711, 7
        %v719 = vadd.s32 %v711, 8
        %v720 = vadd.s32 %v711, 9
        %v721 = vadd.s32 %v711, 10
        %v722 = vadd.s32 %v711, 11
        %v723 = vadd.s32 %v711, 12
        %v724 = vadd.s32 %v711, 13
        %vm725 = vcmp.ge.s32.totalorder %v711, 0
        %vm726 = vcmp.ge.s32.totalorder %v712, 0
        %vm727 = vcmp.ge.s32.totalorder %v713, 0
        %vm728 = vcmp.ge.s32.totalorder %v714, 0
        %vm729 = vcmp.ge.s32.totalorder %v715, 0
        %vm730 = vcmp.ge.s32.totalorder %v716, 0
        %vm731 = vcmp.ge.s32.totalorder %v717, 0
        %vm732 = vcmp.ge.s32.totalorder %v718, 0
        %vm733 = vcmp.ge.s32.totalorder %v719, 0
        %vm734 = vcmp.ge.s32.totalorder %v720, 0
        %vm735 = vcmp.ge.s32.totalorder %v721, 0
        %vm736 = vcmp.ge.s32.totalorder %v722, 0
        %vm737 = vcmp.ge.s32.totalorder %v723, 0
        %vm738 = vcmp.ge.s32.totalorder %v724, 0
        %vm739 = vcmp.lt.s32.totalorder %v711, 16
        %vm740 = vcmp.lt.s32.totalorder %v712, 16
        %vm741 = vcmp.lt.s32.totalorder %v713, 16
        %vm742 = vcmp.lt.s32.totalorder %v714, 16
        %vm743 = vcmp.lt.s32.totalorder %v715, 16
        %vm744 = vcmp.lt.s32.totalorder %v716, 16
        %vm745 = vcmp.lt.s32.totalorder %v717, 16
        %vm746 = vcmp.lt.s32.totalorder %v718, 16
        %vm747 = vcmp.lt.s32.totalorder %v719, 16
        %vm748 = vcmp.lt.s32.totalorder %v720, 16
        %vm749 = vcmp.lt.s32.totalorder %v721, 16
        %vm750 = vcmp.lt.s32.totalorder %v722, 16
        %vm751 = vcmp.lt.s32.totalorder %v723, 16
        %vm752 = vcmp.lt.s32.totalorder %v724, 16
        %vm753 = vmand %vm725, %vm739
        %vm754 = vmand %vm726, %vm740
        %vm755 = vmand %vm727, %vm741
        %vm756 = vmand %vm728, %vm742
        %vm757 = vmand %vm729, %vm743
        %vm758 = vmand %vm730, %vm744
        %vm759 = vmand %vm731, %vm745
        %vm760 = vmand %vm732, %vm746
        %vm761 = vmand %vm733, %vm747
        %vm762 = vmand %vm734, %vm748
        %vm763 = vmand %vm735, %vm749
        %vm764 = vmand %vm736, %vm750
        %vm765 = vmand %vm737, %vm751
        %vm766 = vmand %vm738, %vm752
        %v767 = vsel %vm753, 1, 0
        %v768 = vsel %vm754, 1, 0
        %v769 = vsel %vm755, 1, 0
        %v770 = vsel %vm756, 1, 0
        %v771 = vsel %vm757, 1, 0
        %v772 = vsel %vm758, 1, 0
        %v773 = vsel %vm759, 1, 0
        %v774 = vsel %vm760, 1, 0
        %v775 = vsel %vm761, 1, 0
        %v776 = vsel %vm762, 1, 0
        %v777 = vsel %vm763, 1, 0
        %v778 = vsel %vm764, 1, 0
        %v779 = vsel %vm765, 1, 0
        %v780 = vsel %vm766, 1, 0
        %vm781 = vcmp.eq.s32.totalorder %v767, 1
        %vm782 = vcmp.eq.s32.totalorder %v768, 1
        %vm783 = vcmp.eq.s32.totalorder %v769, 1
        %vm784 = vcmp.eq.s32.totalorder %v770, 1
        %vm785 = vcmp.eq.s32.totalorder %v771, 1
        %vm786 = vcmp.eq.s32.totalorder %v772, 1
        %vm787 = vcmp.eq.s32.totalorder %v773, 1
        %vm788 = vcmp.eq.s32.totalorder %v774, 1
        %vm789 = vcmp.eq.s32.totalorder %v775, 1
        %vm790 = vcmp.eq.s32.totalorder %v776, 1
        %vm791 = vcmp.eq.s32.totalorder %v777, 1
        %vm792 = vcmp.eq.s32.totalorder %v778, 1
        %vm793 = vcmp.eq.s32.totalorder %v779, 1
        %vm794 = vcmp.eq.s32.totalorder %v780, 1
        %v795 = vsel %vm781, %v682, 0.0
        %v796 = vsel %vm781, %v683, 0.0
        %v797 = vsel %vm782, %v684, 0.0
        %v798 = vsel %vm782, %v685, 0.0
        %v799 = vsel %vm783, %v686, 0.0
        %v800 = vsel %vm783, %v687, 0.0
        %v801 = vsel %vm784, %v688, 0.0
        %v802 = vsel %vm784, %v689, 0.0
        %v803 = vsel %vm785, %v690, 0.0
        %v804 = vsel %vm785, %v691, 0.0
        %v805 = vsel %vm786, %v692, 0.0
        %v806 = vsel %vm786, %v693, 0.0
        %v807 = vsel %vm787, %v694, 0.0
        %v808 = vsel %vm787, %v695, 0.0
        %v809 = vsel %vm788, %v696, 0.0
        %v810 = vsel %vm788, %v697, 0.0
        %v811 = vsel %vm789, %v698, 0.0
        %v812 = vsel %vm789, %v699, 0.0
        %v813 = vsel %vm790, %v700, 0.0
        %v814 = vsel %vm790, %v701, 0.0
        %v815 = vsel %vm791, %v702, 0.0
        %v816 = vsel %vm791, %v703, 0.0
        %v817 = vsel %vm792, %v704, 0.0
        %v818 = vsel %vm792, %v705, 0.0
        %v819 = vsel %vm793, %v706, 0.0
        %v820 = vsel %vm793, %v707, 0.0
        %v821 = vsel %vm794, %v708, 0.0
        %v822 = vsel %vm794, %v709, 0.0
        %v823 = vpack.c.bf16 %v795, %v795
        %v824 = vpack.c.bf16 %v796, %v796
        %v825 = vpack.c.bf16 %v797, %v797
        %v826 = vpack.c.bf16 %v798, %v798
        %v827 = vpack.c.bf16 %v799, %v799
        %v828 = vpack.c.bf16 %v800, %v800
        %v829 = vpack.c.bf16 %v801, %v801
        %v830 = vpack.c.bf16 %v802, %v802
        %v831 = vpack.c.bf16 %v803, %v803
        %v832 = vpack.c.bf16 %v804, %v804
        %v833 = vpack.c.bf16 %v805, %v805
        %v834 = vpack.c.bf16 %v806, %v806
        %v835 = vpack.c.bf16 %v807, %v807
        %v836 = vpack.c.bf16 %v808, %v808
        %v837 = vpack.c.bf16 %v809, %v809
        %v838 = vpack.c.bf16 %v810, %v810
        %v839 = vpack.c.bf16 %v811, %v811
        %v840 = vpack.c.bf16 %v812, %v812
        %v841 = vpack.c.bf16 %v813, %v813
        %v842 = vpack.c.bf16 %v814, %v814
        %v843 = vpack.c.bf16 %v815, %v815
        %v844 = vpack.c.bf16 %v816, %v816
        %v845 = vpack.c.bf16 %v817, %v817
        %v846 = vpack.c.bf16 %v818, %v818
        %v847 = vpack.c.bf16 %v819, %v819
        %v848 = vpack.c.bf16 %v820, %v820
        %v849 = vpack.c.bf16 %v821, %v821
        %v850 = vpack.c.bf16 %v822, %v822
        %v879 = vunpack.c.l.b16 %v823
        %v880 = vunpack.c.l.b16 %v824
        %v881 = vunpack.c.l.b16 %v825
        %v882 = vunpack.c.l.b16 %v826
        %v883 = vunpack.c.l.b16 %v827
        %v884 = vunpack.c.l.b16 %v828
        %v885 = vunpack.c.l.b16 %v829
        %v886 = vunpack.c.l.b16 %v830
        %v887 = vunpack.c.l.b16 %v831
        %v888 = vunpack.c.l.b16 %v832
        %v889 = vunpack.c.l.b16 %v833
        %v890 = vunpack.c.l.b16 %v834
        %v891 = vunpack.c.l.b16 %v835
        %v892 = vunpack.c.l.b16 %v836
        %v893 = vunpack.c.l.b16 %v837
        %v894 = vunpack.c.l.b16 %v838
        %v895 = vunpack.c.l.b16 %v839
        %v896 = vunpack.c.l.b16 %v840
        %v897 = vunpack.c.l.b16 %v841
        %v898 = vunpack.c.l.b16 %v842
        %v899 = vunpack.c.l.b16 %v843
        %v900 = vunpack.c.l.b16 %v844
        %v901 = vunpack.c.l.b16 %v845
        %v902 = vunpack.c.l.b16 %v846
        %v903 = vunpack.c.l.b16 %v847
        %v904 = vunpack.c.l.b16 %v848
        %v905 = vunpack.c.l.b16 %v849
        %v906 = vunpack.c.l.b16 %v850
        %v907 = vpack.c.b16 %v880, %v879
        %v908 = vpack.c.b16 %v882, %v881
        %v909 = vpack.c.b16 %v884, %v883
        %v910 = vpack.c.b16 %v886, %v885
        %v911 = vpack.c.b16 %v888, %v887
        %v912 = vpack.c.b16 %v890, %v889
        %v913 = vpack.c.b16 %v892, %v891
        %v914 = vpack.c.b16 %v894, %v893
        %v915 = vpack.c.b16 %v896, %v895
        %v916 = vpack.c.b16 %v898, %v897
        %v917 = vpack.c.b16 %v900, %v899
        %v918 = vpack.c.b16 %v902, %v901
        %v919 = vpack.c.b16 %v904, %v903
        %v920 = vpack.c.b16 %v906, %v905
        %v922 = vshrl.u32 %v907, 16
        %v924 = vrot.slane %v922, 7
        %v925 = vshll.u32 %v907, 16
        %v927 = vor.u32 %v924, %v925
        %v929 = vshrl.u32 %v908, 16
        %v931 = vrot.slane %v929, 7
        %v932 = vshll.u32 %v908, 16
        %v934 = vor.u32 %v931, %v932
        %v936 = vshrl.u32 %v909, 16
        %v938 = vrot.slane %v936, 7
        %v939 = vshll.u32 %v909, 16
        %v941 = vor.u32 %v938, %v939
        %v943 = vshrl.u32 %v910, 16
        %v945 = vrot.slane %v943, 7
        %v946 = vshll.u32 %v910, 16
        %v948 = vor.u32 %v945, %v946
        %v950 = vshrl.u32 %v911, 16
        %v952 = vrot.slane %v950, 7
        %v953 = vshll.u32 %v911, 16
        %v955 = vor.u32 %v952, %v953
        %v957 = vshrl.u32 %v912, 16
        %v959 = vrot.slane %v957, 7
        %v960 = vshll.u32 %v912, 16
        %v962 = vor.u32 %v959, %v960
        %v964 = vshrl.u32 %v913, 16
        %v966 = vrot.slane %v964, 7
        %v967 = vshll.u32 %v913, 16
        %v969 = vor.u32 %v966, %v967
        %v971 = vshrl.u32 %v914, 16
        %v973 = vrot.slane %v971, 7
        %v974 = vshll.u32 %v914, 16
        %v976 = vor.u32 %v973, %v974
        %v978 = vshrl.u32 %v915, 16
        %v980 = vrot.slane %v978, 7
        %v981 = vshll.u32 %v915, 16
        %v983 = vor.u32 %v980, %v981
        %v985 = vshrl.u32 %v916, 16
        %v987 = vrot.slane %v985, 7
        %v988 = vshll.u32 %v916, 16
        %v990 = vor.u32 %v987, %v988
        %v992 = vshrl.u32 %v917, 16
        %v994 = vrot.slane %v992, 7
        %v995 = vshll.u32 %v917, 16
        %v997 = vor.u32 %v994, %v995
        %v999 = vshrl.u32 %v918, 16
        %v1001 = vrot.slane %v999, 7
        %v1002 = vshll.u32 %v918, 16
        %v1004 = vor.u32 %v1001, %v1002
        %v1006 = vshrl.u32 %v919, 16
        %v1008 = vrot.slane %v1006, 7
        %v1009 = vshll.u32 %v919, 16
        %v1011 = vor.u32 %v1008, %v1009
        %v1013 = vshrl.u32 %v920, 16
        %v1015 = vrot.slane %v1013, 7
        %v1016 = vshll.u32 %v920, 16
        %v1018 = vor.u32 %v1015, %v1016
        %vm1047 = vcmask 1040384
        %vm1048 = vsmask.f32 256
        %vm1049 = vmand %vm1047, %vm1048
        %v1050 = vsel %vm1049, 0, %v927
        %v1051 = vsel %vm1049, 0, %v934
        %v1052 = vsel %vm1049, 0, %v941
        %v1053 = vsel %vm1049, 0, %v948
        %v1054 = vsel %vm1049, 0, %v955
        %v1055 = vsel %vm1049, 0, %v962
        %v1056 = vsel %vm1049, 0, %v969
        %v1057 = vsel %vm1049, 0, %v976
        %v1058 = vsel %vm1049, 0, %v983
        %v1059 = vsel %vm1049, 0, %v990
        %v1060 = vsel %vm1049, 0, %v997
        %v1061 = vsel %vm1049, 0, %v1004
        %v1062 = vsel %vm1049, 0, %v1011
        %v1063 = vsel %vm1049, 0, %v1018
        %v1064 = vsel %vm1049, %v924, 0
        %v1065 = vsel %vm1049, %v931, 0
        %v1066 = vsel %vm1049, %v938, 0
        %v1067 = vsel %vm1049, %v945, 0
        %v1068 = vsel %vm1049, %v952, 0
        %v1069 = vsel %vm1049, %v959, 0
        %v1070 = vsel %vm1049, %v966, 0
        %v1071 = vsel %vm1049, %v973, 0
        %v1072 = vsel %vm1049, %v980, 0
        %v1073 = vsel %vm1049, %v987, 0
        %v1074 = vsel %vm1049, %v994, 0
        %v1075 = vsel %vm1049, %v1001, 0
        %v1076 = vsel %vm1049, %v1008, 0
        %v1077 = vsel %vm1049, %v1015, 0
        %vm1078 = vsmask.f32 7424
        %v1080 = vshrl.u32 %v1050, 16
        %v1082 = vshll.u32 %v1050, 16
        %v1084 = vrot.slane %v1082, 1
        %v1085 = vor.u32 %v1080, %v1084
        %v1087 = vshll.u32 %v1064, 16
        %v1089 = vrot.slane %v1087, 1
        %v1090 = vsel %vm1078, %v1085, %v1089
        %v1092 = vshrl.u32 %v1051, 16
        %v1094 = vshll.u32 %v1051, 16
        %v1096 = vrot.slane %v1094, 1
        %v1097 = vor.u32 %v1092, %v1096
        %v1099 = vshll.u32 %v1065, 16
        %v1101 = vrot.slane %v1099, 1
        %v1102 = vsel %vm1078, %v1097, %v1101
        %v1104 = vshrl.u32 %v1052, 16
        %v1106 = vshll.u32 %v1052, 16
        %v1108 = vrot.slane %v1106, 1
        %v1109 = vor.u32 %v1104, %v1108
        %v1111 = vshll.u32 %v1066, 16
        %v1113 = vrot.slane %v1111, 1
        %v1114 = vsel %vm1078, %v1109, %v1113
        %v1116 = vshrl.u32 %v1053, 16
        %v1118 = vshll.u32 %v1053, 16
        %v1120 = vrot.slane %v1118, 1
        %v1121 = vor.u32 %v1116, %v1120
        %v1123 = vshll.u32 %v1067, 16
        %v1125 = vrot.slane %v1123, 1
        %v1126 = vsel %vm1078, %v1121, %v1125
        %v1128 = vshrl.u32 %v1054, 16
        %v1130 = vshll.u32 %v1054, 16
        %v1132 = vrot.slane %v1130, 1
        %v1133 = vor.u32 %v1128, %v1132
        %v1135 = vshll.u32 %v1068, 16
        %v1137 = vrot.slane %v1135, 1
        %v1138 = vsel %vm1078, %v1133, %v1137
        %v1140 = vshrl.u32 %v1055, 16
        %v1142 = vshll.u32 %v1055, 16
        %v1144 = vrot.slane %v1142, 1
        %v1145 = vor.u32 %v1140, %v1144
        %v1147 = vshll.u32 %v1069, 16
        %v1149 = vrot.slane %v1147, 1
        %v1150 = vsel %vm1078, %v1145, %v1149
        %v1152 = vshrl.u32 %v1056, 16
        %v1154 = vshll.u32 %v1056, 16
        %v1156 = vrot.slane %v1154, 1
        %v1157 = vor.u32 %v1152, %v1156
        %v1159 = vshll.u32 %v1070, 16
        %v1161 = vrot.slane %v1159, 1
        %v1162 = vsel %vm1078, %v1157, %v1161
        %v1164 = vshrl.u32 %v1057, 16
        %v1166 = vshll.u32 %v1057, 16
        %v1168 = vrot.slane %v1166, 1
        %v1169 = vor.u32 %v1164, %v1168
        %v1171 = vshll.u32 %v1071, 16
        %v1173 = vrot.slane %v1171, 1
        %v1174 = vsel %vm1078, %v1169, %v1173
        %v1176 = vshrl.u32 %v1058, 16
        %v1178 = vshll.u32 %v1058, 16
        %v1180 = vrot.slane %v1178, 1
        %v1181 = vor.u32 %v1176, %v1180
        %v1183 = vshll.u32 %v1072, 16
        %v1185 = vrot.slane %v1183, 1
        %v1186 = vsel %vm1078, %v1181, %v1185
        %v1188 = vshrl.u32 %v1059, 16
        %v1190 = vshll.u32 %v1059, 16
        %v1192 = vrot.slane %v1190, 1
        %v1193 = vor.u32 %v1188, %v1192
        %v1195 = vshll.u32 %v1073, 16
        %v1197 = vrot.slane %v1195, 1
        %v1198 = vsel %vm1078, %v1193, %v1197
        %v1200 = vshrl.u32 %v1060, 16
        %v1202 = vshll.u32 %v1060, 16
        %v1204 = vrot.slane %v1202, 1
        %v1205 = vor.u32 %v1200, %v1204
        %v1207 = vshll.u32 %v1074, 16
        %v1209 = vrot.slane %v1207, 1
        %v1210 = vsel %vm1078, %v1205, %v1209
        %v1212 = vshrl.u32 %v1061, 16
        %v1214 = vshll.u32 %v1061, 16
        %v1216 = vrot.slane %v1214, 1
        %v1217 = vor.u32 %v1212, %v1216
        %v1219 = vshll.u32 %v1075, 16
        %v1221 = vrot.slane %v1219, 1
        %v1222 = vsel %vm1078, %v1217, %v1221
        %v1224 = vshrl.u32 %v1062, 16
        %v1226 = vshll.u32 %v1062, 16
        %v1228 = vrot.slane %v1226, 1
        %v1229 = vor.u32 %v1224, %v1228
        %v1231 = vshll.u32 %v1076, 16
        %v1233 = vrot.slane %v1231, 1
        %v1234 = vsel %vm1078, %v1229, %v1233
        %v1236 = vshrl.u32 %v1063, 16
        %v1238 = vshll.u32 %v1063, 16
        %v1240 = vrot.slane %v1238, 1
        %v1241 = vor.u32 %v1236, %v1240
        %v1243 = vshll.u32 %v1077, 16
        %v1245 = vrot.slane %v1243, 1
        %v1246 = vsel %vm1078, %v1241, %v1245
        %1247 = vrot.lane.b32.xlu0 %v1090, 64
        %v1248 = vpop.permute.xlu0 %1247
        %1249 = vrot.lane.b32.xlu0 %v1102, 64
        %v1250 = vpop.permute.xlu0 %1249
        %1251 = vrot.lane.b32.xlu0 %v1114, 64
        %v1252 = vpop.permute.xlu0 %1251
        %1253 = vrot.lane.b32.xlu0 %v1126, 64
        %v1254 = vpop.permute.xlu0 %1253
        %1255 = vrot.lane.b32.xlu0 %v1138, 64
        %v1256 = vpop.permute.xlu0 %1255
        %1257 = vrot.lane.b32.xlu0 %v1150, 64
        %v1258 = vpop.permute.xlu0 %1257
        %1259 = vrot.lane.b32.xlu0 %v1162, 64
        %v1260 = vpop.permute.xlu0 %1259
        %1261 = vrot.lane.b32.xlu0 %v1174, 64
        %v1262 = vpop.permute.xlu0 %1261
        %1263 = vrot.lane.b32.xlu0 %v1186, 64
        %v1264 = vpop.permute.xlu0 %1263
        %1265 = vrot.lane.b32.xlu0 %v1198, 64
        %v1266 = vpop.permute.xlu0 %1265
        %1267 = vrot.lane.b32.xlu0 %v1210, 64
        %v1268 = vpop.permute.xlu0 %1267
        %1269 = vrot.lane.b32.xlu0 %v1222, 64
        %v1270 = vpop.permute.xlu0 %1269
        %1271 = vrot.lane.b32.xlu0 %v1234, 64
        %v1272 = vpop.permute.xlu0 %1271
        %1273 = vrot.lane.b32.xlu0 %v1246, 64
        %v1274 = vpop.permute.xlu0 %1273
        %vm1303 = vcmask 1046528
        %v1304 = vrot.slane %v1050, 1
        %v1305 = vrot.slane %v1064, 1
        %v1306 = vsel %vm1303, %v1304, %v1305
        %v1307 = vrot.slane %v1051, 1
        %v1308 = vrot.slane %v1065, 1
        %v1309 = vsel %vm1303, %v1307, %v1308
        %v1310 = vrot.slane %v1052, 1
        %v1311 = vrot.slane %v1066, 1
        %v1312 = vsel %vm1303, %v1310, %v1311
        %v1313 = vrot.slane %v1053, 1
        %v1314 = vrot.slane %v1067, 1
        %v1315 = vsel %vm1303, %v1313, %v1314
        %v1316 = vrot.slane %v1054, 1
        %v1317 = vrot.slane %v1068, 1
        %v1318 = vsel %vm1303, %v1316, %v1317
        %v1319 = vrot.slane %v1055, 1
        %v1320 = vrot.slane %v1069, 1
        %v1321 = vsel %vm1303, %v1319, %v1320
        %v1322 = vrot.slane %v1056, 1
        %v1323 = vrot.slane %v1070, 1
        %v1324 = vsel %vm1303, %v1322, %v1323
        %v1325 = vrot.slane %v1057, 1
        %v1326 = vrot.slane %v1071, 1
        %v1327 = vsel %vm1303, %v1325, %v1326
        %v1328 = vrot.slane %v1058, 1
        %v1329 = vrot.slane %v1072, 1
        %v1330 = vsel %vm1303, %v1328, %v1329
        %v1331 = vrot.slane %v1059, 1
        %v1332 = vrot.slane %v1073, 1
        %v1333 = vsel %vm1303, %v1331, %v1332
        %v1334 = vrot.slane %v1060, 1
        %v1335 = vrot.slane %v1074, 1
        %v1336 = vsel %vm1303, %v1334, %v1335
        %v1337 = vrot.slane %v1061, 1
        %v1338 = vrot.slane %v1075, 1
        %v1339 = vsel %vm1303, %v1337, %v1338
        %v1340 = vrot.slane %v1062, 1
        %v1341 = vrot.slane %v1076, 1
        %v1342 = vsel %vm1303, %v1340, %v1341
        %v1343 = vrot.slane %v1063, 1
        %v1344 = vrot.slane %v1077, 1
        %v1345 = vsel %vm1303, %v1343, %v1344
        %vm1346 = vcmask 523264
        %v1348 = vsel %vm1346, %v1050, %v1248
        %v1351 = vsel %vm1346, %v1051, %v1250
        %v1354 = vsel %vm1346, %v1052, %v1252
        %v1357 = vsel %vm1346, %v1053, %v1254
        %v1360 = vsel %vm1346, %v1054, %v1256
        %v1363 = vsel %vm1346, %v1055, %v1258
        %v1366 = vsel %vm1346, %v1056, %v1260
        %v1369 = vsel %vm1346, %v1057, %v1262
        %v1372 = vsel %vm1346, %v1058, %v1264
        %v1375 = vsel %vm1346, %v1059, %v1266
        %v1378 = vsel %vm1346, %v1060, %v1268
        %v1381 = vsel %vm1346, %v1061, %v1270
        %v1384 = vsel %vm1346, %v1062, %v1272
        %v1387 = vsel %vm1346, %v1063, %v1274
        %v1389 = vld [vmem:[%s3] sm:$0xff]
        %v1390 = vld [vmem:[%s3 + $0x8] sm:$0xff]
        %v1391 = vld [vmem:[%s3 + $0x10] sm:$0xff]
        %v1392 = vld [vmem:[%s3 + $0x18] sm:$0xff]
        %v1393 = vld [vmem:[%s3 + $0x20] sm:$0xff]
        %v1394 = vld [vmem:[%s3 + $0x28] sm:$0xff]
        %v1395 = vld [vmem:[%s3 + $0x30] sm:$0xff]
        %v1396 = vld [vmem:[%s3 + $0x38] sm:$0xff]
        %v1397 = vld [vmem:[%s3 + $0x40] sm:$0xff]
        %v1398 = vld [vmem:[%s3 + $0x48] sm:$0xff]
        %v1399 = vld [vmem:[%s3 + $0x50] sm:$0xff]
        %v1400 = vld [vmem:[%s3 + $0x58] sm:$0xff]
        %v1401 = vld [vmem:[%s3 + $0x60] sm:$0xff]
        %v1402 = vld [vmem:[%s3 + $0x68] sm:$0xff]
        %v1403 = vld [vmem:[%s3 + $0x70] sm:$0xff]
        %v1404 = vld [vmem:[%s3 + $0x78] sm:$0xff]
        %v1405 = vld [vmem:[%s3 + $0x80] sm:$0xff]
        %v1406 = vld [vmem:[%s3 + $0x88] sm:$0xff]
        %v1407 = vld [vmem:[%s3 + $0x90] sm:$0xff]
        %v1408 = vld [vmem:[%s3 + $0x98] sm:$0xff]
        %v1409 = vld [vmem:[%s3 + $0xa0] sm:$0xff]
        %v1410 = vld [vmem:[%s3 + $0xa8] sm:$0xff]
        %v1411 = vld [vmem:[%s3 + $0xb0] sm:$0xff]
        %v1412 = vld [vmem:[%s3 + $0xb8] sm:$0xff]
        %v1437 = vunpack.c.l.b16 %v1389
        %v1438 = vunpack.c.h.b16 %v1389
        %v1439 = vunpack.c.l.b16 %v1390
        %v1440 = vunpack.c.h.b16 %v1390
        %v1441 = vunpack.c.l.b16 %v1391
        %v1442 = vunpack.c.h.b16 %v1391
        %v1443 = vunpack.c.l.b16 %v1392
        %v1444 = vunpack.c.h.b16 %v1392
        %v1445 = vunpack.c.l.b16 %v1393
        %v1446 = vunpack.c.h.b16 %v1393
        %v1447 = vunpack.c.l.b16 %v1394
        %v1448 = vunpack.c.h.b16 %v1394
        %v1449 = vunpack.c.l.b16 %v1395
        %v1450 = vunpack.c.h.b16 %v1395
        %v1451 = vunpack.c.l.b16 %v1396
        %v1452 = vunpack.c.h.b16 %v1396
        %v1453 = vunpack.c.l.b16 %v1397
        %v1454 = vunpack.c.h.b16 %v1397
        %v1455 = vunpack.c.l.b16 %v1398
        %v1456 = vunpack.c.h.b16 %v1398
        %v1457 = vunpack.c.l.b16 %v1399
        %v1458 = vunpack.c.h.b16 %v1399
        %v1459 = vunpack.c.l.b16 %v1400
        %v1460 = vunpack.c.h.b16 %v1400
        %v1461 = vunpack.c.l.b16 %v1401
        %v1462 = vunpack.c.h.b16 %v1401
        %v1463 = vunpack.c.l.b16 %v1402
        %v1464 = vunpack.c.h.b16 %v1402
        %v1465 = vunpack.c.l.b16 %v1403
        %v1466 = vunpack.c.h.b16 %v1403
        %v1467 = vunpack.c.l.b16 %v1404
        %v1468 = vunpack.c.h.b16 %v1404
        %v1469 = vunpack.c.l.b16 %v1405
        %v1470 = vunpack.c.h.b16 %v1405
        %v1471 = vunpack.c.l.b16 %v1406
        %v1472 = vunpack.c.h.b16 %v1406
        %v1473 = vunpack.c.l.b16 %v1407
        %v1474 = vunpack.c.h.b16 %v1407
        %v1475 = vunpack.c.l.b16 %v1408
        %v1476 = vunpack.c.h.b16 %v1408
        %v1477 = vunpack.c.l.b16 %v1409
        %v1478 = vunpack.c.h.b16 %v1409
        %v1479 = vunpack.c.l.b16 %v1410
        %v1480 = vunpack.c.h.b16 %v1410
        %v1481 = vunpack.c.l.b16 %v1411
        %v1482 = vunpack.c.h.b16 %v1411
        %v1483 = vunpack.c.l.b16 %v1412
        %v1484 = vunpack.c.h.b16 %v1412
        %v1485 = vpack.c.b16 %v1439, %v1437
        %v1486 = vpack.c.b16 %v1440, %v1438
        %v1487 = vpack.c.b16 %v1443, %v1441
        %v1488 = vpack.c.b16 %v1444, %v1442
        %v1489 = vpack.c.b16 %v1447, %v1445
        %v1490 = vpack.c.b16 %v1448, %v1446
        %v1491 = vpack.c.b16 %v1451, %v1449
        %v1492 = vpack.c.b16 %v1452, %v1450
        %v1493 = vpack.c.b16 %v1455, %v1453
        %v1494 = vpack.c.b16 %v1456, %v1454
        %v1495 = vpack.c.b16 %v1459, %v1457
        %v1496 = vpack.c.b16 %v1460, %v1458
        %v1497 = vpack.c.b16 %v1463, %v1461
        %v1498 = vpack.c.b16 %v1464, %v1462
        %v1499 = vpack.c.b16 %v1467, %v1465
        %v1500 = vpack.c.b16 %v1468, %v1466
        %v1501 = vpack.c.b16 %v1471, %v1469
        %v1502 = vpack.c.b16 %v1472, %v1470
        %v1503 = vpack.c.b16 %v1475, %v1473
        %v1504 = vpack.c.b16 %v1476, %v1474
        %v1505 = vpack.c.b16 %v1479, %v1477
        %v1506 = vpack.c.b16 %v1480, %v1478
        %v1507 = vpack.c.b16 %v1483, %v1481
        %v1508 = vpack.c.b16 %v1484, %v1482
        %v1534 = vsel %vm1346, %v1306, 0
        %v1537 = vsel %vm1346, %v1309, 0
        %v1540 = vsel %vm1346, %v1312, 0
        %v1543 = vsel %vm1346, %v1315, 0
        %v1546 = vsel %vm1346, %v1318, 0
        %v1549 = vsel %vm1346, %v1321, 0
        %v1552 = vsel %vm1346, %v1324, 0
        %v1555 = vsel %vm1346, %v1327, 0
        %v1558 = vsel %vm1346, %v1330, 0
        %v1561 = vsel %vm1346, %v1333, 0
        %v1564 = vsel %vm1346, %v1336, 0
        %v1567 = vsel %vm1346, %v1339, 0
        %v1570 = vsel %vm1346, %v1342, 0
        %v1573 = vsel %vm1346, %v1345, 0
        %1575 = vmatpush.bf16.msra.mxu0 %v1499
        %1576 = vmatpush.bf16.msra.mxu0 %v1497
        %1577 = vmatpush.bf16.msra.mxu0 %v1495
        %1578 = vmatpush.bf16.msra.mxu0 %v1493
        %1579 = vmatpush.bf16.msra.mxu0 %v1491
        %1580 = vmatpush.bf16.msra.mxu0 %v1489
        %1581 = vmatpush.bf16.msra.mxu0 %v1487
        %1582 = vmatpush.bf16.msra.mxu0 %v1485
        %1583 = vmatmul.bf16.gmra.mxu0 %v1348
        %v1584 = vpop.f32.mrf.mxu0
        %v1585 = vadd.f32 0.0, %v1584
        %v1586 = vpop.f32.mrf.mxu0
        %v1587 = vadd.f32 0.0, %v1586
        %1588 = vmatmul.bf16.gmra.mxu0 %v1351
        %v1589 = vpop.f32.mrf.mxu0
        %v1590 = vadd.f32 0.0, %v1589
        %v1591 = vpop.f32.mrf.mxu0
        %v1592 = vadd.f32 0.0, %v1591
        %1593 = vmatmul.bf16.gmra.mxu0 %v1354
        %v1594 = vpop.f32.mrf.mxu0
        %v1595 = vadd.f32 0.0, %v1594
        %v1596 = vpop.f32.mrf.mxu0
        %v1597 = vadd.f32 0.0, %v1596
        %1598 = vmatmul.bf16.gmra.mxu0 %v1357
        %v1599 = vpop.f32.mrf.mxu0
        %v1600 = vadd.f32 0.0, %v1599
        %v1601 = vpop.f32.mrf.mxu0
        %v1602 = vadd.f32 0.0, %v1601
        %1603 = vmatmul.bf16.gmra.mxu0 %v1360
        %v1604 = vpop.f32.mrf.mxu0
        %v1605 = vadd.f32 0.0, %v1604
        %v1606 = vpop.f32.mrf.mxu0
        %v1607 = vadd.f32 0.0, %v1606
        %1608 = vmatmul.bf16.gmra.mxu0 %v1363
        %v1609 = vpop.f32.mrf.mxu0
        %v1610 = vadd.f32 0.0, %v1609
        %v1611 = vpop.f32.mrf.mxu0
        %v1612 = vadd.f32 0.0, %v1611
        %1613 = vmatmul.bf16.gmra.mxu0 %v1366
        %v1614 = vpop.f32.mrf.mxu0
        %v1615 = vadd.f32 0.0, %v1614
        %v1616 = vpop.f32.mrf.mxu0
        %v1617 = vadd.f32 0.0, %v1616
        %1618 = vmatmul.bf16.gmra.mxu0 %v1369
        %v1619 = vpop.f32.mrf.mxu0
        %v1620 = vadd.f32 0.0, %v1619
        %v1621 = vpop.f32.mrf.mxu0
        %v1622 = vadd.f32 0.0, %v1621
        %1623 = vmatmul.bf16.gmra.mxu0 %v1372
        %v1624 = vpop.f32.mrf.mxu0
        %v1625 = vadd.f32 0.0, %v1624
        %v1626 = vpop.f32.mrf.mxu0
        %v1627 = vadd.f32 0.0, %v1626
        %1628 = vmatmul.bf16.gmra.mxu0 %v1375
        %v1629 = vpop.f32.mrf.mxu0
        %v1630 = vadd.f32 0.0, %v1629
        %v1631 = vpop.f32.mrf.mxu0
        %v1632 = vadd.f32 0.0, %v1631
        %1633 = vmatmul.bf16.gmra.mxu0 %v1378
        %v1634 = vpop.f32.mrf.mxu0
        %v1635 = vadd.f32 0.0, %v1634
        %v1636 = vpop.f32.mrf.mxu0
        %v1637 = vadd.f32 0.0, %v1636
        %1638 = vmatmul.bf16.gmra.mxu0 %v1381
        %v1639 = vpop.f32.mrf.mxu0
        %v1640 = vadd.f32 0.0, %v1639
        %v1641 = vpop.f32.mrf.mxu0
        %v1642 = vadd.f32 0.0, %v1641
        %1643 = vmatmul.bf16.gmra.mxu0 %v1384
        %v1644 = vpop.f32.mrf.mxu0
        %v1645 = vadd.f32 0.0, %v1644
        %v1646 = vpop.f32.mrf.mxu0
        %v1647 = vadd.f32 0.0, %v1646
        %1648 = vmatmul.bf16.gmra.mxu0 %v1387
        %v1649 = vpop.f32.mrf.mxu0
        %v1650 = vpop.f32.mrf.mxu0
        %1651 = vdwg.mxu0
        %1652 = vmatpush.bf16.msra.mxu0 0
        %1653 = vmatpush.bf16.msra.mxu0 0
        %1654 = vmatpush.bf16.msra.mxu0 0
        %1655 = vmatpush.bf16.msra.mxu0 0
        %1656 = vmatpush.bf16.msra.mxu0 %v1507
        %1657 = vmatpush.bf16.msra.mxu0 %v1505
        %1658 = vmatpush.bf16.msra.mxu0 %v1503
        %1659 = vmatpush.bf16.msra.mxu0 %v1501
        %1660 = vmatmul.bf16.gmra.mxu0 %v1534
        %v1661 = vpop.f32.mrf.mxu0
        %v1662 = vadd.f32 %v1585, %v1661
        %v1663 = vpop.f32.mrf.mxu0
        %v1664 = vadd.f32 %v1587, %v1663
        %1665 = vmatmul.bf16.gmra.mxu0 %v1537
        %v1666 = vpop.f32.mrf.mxu0
        %v1667 = vadd.f32 %v1590, %v1666
        %v1668 = vpop.f32.mrf.mxu0
        %v1669 = vadd.f32 %v1592, %v1668
        %1670 = vmatmul.bf16.gmra.mxu0 %v1540
        %v1671 = vpop.f32.mrf.mxu0
        %v1672 = vadd.f32 %v1595, %v1671
        %v1673 = vpop.f32.mrf.mxu0
        %v1674 = vadd.f32 %v1597, %v1673
        %1675 = vmatmul.bf16.gmra.mxu0 %v1543
        %v1676 = vpop.f32.mrf.mxu0
        %v1677 = vadd.f32 %v1600, %v1676
        %v1678 = vpop.f32.mrf.mxu0
        %v1679 = vadd.f32 %v1602, %v1678
        %1680 = vmatmul.bf16.gmra.mxu0 %v1546
        %v1681 = vpop.f32.mrf.mxu0
        %v1682 = vadd.f32 %v1605, %v1681
        %v1683 = vpop.f32.mrf.mxu0
        %v1684 = vadd.f32 %v1607, %v1683
        %1685 = vmatmul.bf16.gmra.mxu0 %v1549
        %v1686 = vpop.f32.mrf.mxu0
        %v1687 = vadd.f32 %v1610, %v1686
        %v1688 = vpop.f32.mrf.mxu0
        %v1689 = vadd.f32 %v1612, %v1688
        %1690 = vmatmul.bf16.gmra.mxu0 %v1552
        %v1691 = vpop.f32.mrf.mxu0
        %v1692 = vadd.f32 %v1615, %v1691
        %v1693 = vpop.f32.mrf.mxu0
        %v1694 = vadd.f32 %v1617, %v1693
        %1695 = vmatmul.bf16.gmra.mxu0 %v1555
        %v1696 = vpop.f32.mrf.mxu0
        %v1697 = vadd.f32 %v1620, %v1696
        %v1698 = vpop.f32.mrf.mxu0
        %v1699 = vadd.f32 %v1622, %v1698
        %1700 = vmatmul.bf16.gmra.mxu0 %v1558
        %v1701 = vpop.f32.mrf.mxu0
        %v1702 = vadd.f32 %v1625, %v1701
        %v1703 = vpop.f32.mrf.mxu0
        %v1704 = vadd.f32 %v1627, %v1703
        %1705 = vmatmul.bf16.gmra.mxu0 %v1561
        %v1706 = vpop.f32.mrf.mxu0
        %v1707 = vadd.f32 %v1630, %v1706
        %v1708 = vpop.f32.mrf.mxu0
        %v1709 = vadd.f32 %v1632, %v1708
        %1710 = vmatmul.bf16.gmra.mxu0 %v1564
        %v1711 = vpop.f32.mrf.mxu0
        %v1712 = vadd.f32 %v1635, %v1711
        %v1713 = vpop.f32.mrf.mxu0
        %v1714 = vadd.f32 %v1637, %v1713
        %1715 = vmatmul.bf16.gmra.mxu0 %v1567
        %v1716 = vpop.f32.mrf.mxu0
        %v1717 = vadd.f32 %v1640, %v1716
        %v1718 = vpop.f32.mrf.mxu0
        %v1719 = vadd.f32 %v1642, %v1718
        %1720 = vmatmul.bf16.gmra.mxu0 %v1570
        %v1721 = vpop.f32.mrf.mxu0
        %v1722 = vadd.f32 %v1645, %v1721
        %v1723 = vpop.f32.mrf.mxu0
        %v1724 = vadd.f32 %v1647, %v1723
        %1725 = vmatmul.bf16.gmra.mxu0 %v1573
        %v1726 = vpop.f32.mrf.mxu0
        %v1727 = vpop.f32.mrf.mxu0
        %1728 = vdwg.mxu0
        %1729 = vmatpush.bf16.msra.mxu0 %v1500
        %1730 = vmatpush.bf16.msra.mxu0 %v1498
        %1731 = vmatpush.bf16.msra.mxu0 %v1496
        %1732 = vmatpush.bf16.msra.mxu0 %v1494
        %1733 = vmatpush.bf16.msra.mxu0 %v1492
        %1734 = vmatpush.bf16.msra.mxu0 %v1490
        %1735 = vmatpush.bf16.msra.mxu0 %v1488
        %1736 = vmatpush.bf16.msra.mxu0 %v1486
        %1737 = vmatmul.bf16.gmra.mxu0 %v1348
        %v1738 = vpop.f32.mrf.mxu0
        %v1739 = vpop.f32.mrf.mxu0
        %1740 = vmatmul.bf16.gmra.mxu0 %v1351
        %v1741 = vpop.f32.mrf.mxu0
        %v1742 = vpop.f32.mrf.mxu0
        %1743 = vmatmul.bf16.gmra.mxu0 %v1354
        %v1744 = vpop.f32.mrf.mxu0
        %v1745 = vadd.f32 0.0, %v1744
        %v1746 = vpop.f32.mrf.mxu0
        %v1747 = vadd.f32 0.0, %v1746
        %1748 = vmatmul.bf16.gmra.mxu0 %v1357
        %v1749 = vpop.f32.mrf.mxu0
        %v1750 = vadd.f32 0.0, %v1749
        %v1751 = vpop.f32.mrf.mxu0
        %v1752 = vadd.f32 0.0, %v1751
        %1753 = vmatmul.bf16.gmra.mxu0 %v1360
        %v1754 = vpop.f32.mrf.mxu0
        %v1755 = vadd.f32 0.0, %v1754
        %v1756 = vpop.f32.mrf.mxu0
        %v1757 = vadd.f32 0.0, %v1756
        %1758 = vmatmul.bf16.gmra.mxu0 %v1363
        %v1759 = vpop.f32.mrf.mxu0
        %v1760 = vadd.f32 0.0, %v1759
        %v1761 = vpop.f32.mrf.mxu0
        %v1762 = vadd.f32 0.0, %v1761
        %1763 = vmatmul.bf16.gmra.mxu0 %v1366
        %v1764 = vpop.f32.mrf.mxu0
        %v1765 = vadd.f32 0.0, %v1764
        %v1766 = vpop.f32.mrf.mxu0
        %v1767 = vadd.f32 0.0, %v1766
        %1768 = vmatmul.bf16.gmra.mxu0 %v1369
        %v1769 = vpop.f32.mrf.mxu0
        %v1770 = vadd.f32 0.0, %v1769
        %v1771 = vpop.f32.mrf.mxu0
        %v1772 = vadd.f32 0.0, %v1771
        %1773 = vmatmul.bf16.gmra.mxu0 %v1372
        %v1774 = vpop.f32.mrf.mxu0
        %v1775 = vadd.f32 0.0, %v1774
        %v1776 = vpop.f32.mrf.mxu0
        %v1777 = vadd.f32 0.0, %v1776
        %1778 = vmatmul.bf16.gmra.mxu0 %v1375
        %v1779 = vpop.f32.mrf.mxu0
        %v1780 = vadd.f32 0.0, %v1779
        %v1781 = vpop.f32.mrf.mxu0
        %v1782 = vadd.f32 0.0, %v1781
        %1783 = vmatmul.bf16.gmra.mxu0 %v1378
        %v1784 = vpop.f32.mrf.mxu0
        %v1785 = vadd.f32 0.0, %v1784
        %v1786 = vpop.f32.mrf.mxu0
        %v1787 = vadd.f32 0.0, %v1786
        %1788 = vmatmul.bf16.gmra.mxu0 %v1381
        %v1789 = vpop.f32.mrf.mxu0
        %v1790 = vadd.f32 0.0, %v1789
        %v1791 = vpop.f32.mrf.mxu0
        %v1792 = vadd.f32 0.0, %v1791
        %1793 = vmatmul.bf16.gmra.mxu0 %v1384
        %v1794 = vpop.f32.mrf.mxu0
        %v1795 = vadd.f32 0.0, %v1794
        %v1796 = vpop.f32.mrf.mxu0
        %v1797 = vadd.f32 0.0, %v1796
        %1798 = vmatmul.bf16.gmra.mxu0 %v1387
        %v1799 = vpop.f32.mrf.mxu0
        %v1800 = vadd.f32 0.0, %v1799
        %v1801 = vpop.f32.mrf.mxu0
        %v1802 = vadd.f32 0.0, %v1801
        %1803 = vdwg.mxu0
        %1804 = vmatpush.bf16.msra.mxu0 0
        %1805 = vmatpush.bf16.msra.mxu0 0
        %1806 = vmatpush.bf16.msra.mxu0 0
        %1807 = vmatpush.bf16.msra.mxu0 0
        %1808 = vmatpush.bf16.msra.mxu0 %v1508
        %1809 = vmatpush.bf16.msra.mxu0 %v1506
        %1810 = vmatpush.bf16.msra.mxu0 %v1504
        %1811 = vmatpush.bf16.msra.mxu0 %v1502
        %1812 = vmatmul.bf16.gmra.mxu0 %v1534
        %v1813 = vpop.f32.mrf.mxu0
        %v1814 = vpop.f32.mrf.mxu0
        %1815 = vmatmul.bf16.gmra.mxu0 %v1537
        %v1816 = vpop.f32.mrf.mxu0
        %v1817 = vpop.f32.mrf.mxu0
        %1818 = vmatmul.bf16.gmra.mxu0 %v1540
        %v1819 = vpop.f32.mrf.mxu0
        %v1820 = vadd.f32 %v1745, %v1819
        %v1821 = vpop.f32.mrf.mxu0
        %v1822 = vadd.f32 %v1747, %v1821
        %1823 = vmatmul.bf16.gmra.mxu0 %v1543
        %v1824 = vpop.f32.mrf.mxu0
        %v1825 = vadd.f32 %v1750, %v1824
        %v1826 = vpop.f32.mrf.mxu0
        %v1827 = vadd.f32 %v1752, %v1826
        %1828 = vmatmul.bf16.gmra.mxu0 %v1546
        %v1829 = vpop.f32.mrf.mxu0
        %v1830 = vadd.f32 %v1755, %v1829
        %v1831 = vpop.f32.mrf.mxu0
        %v1832 = vadd.f32 %v1757, %v1831
        %1833 = vmatmul.bf16.gmra.mxu0 %v1549
        %v1834 = vpop.f32.mrf.mxu0
        %v1835 = vadd.f32 %v1760, %v1834
        %v1836 = vpop.f32.mrf.mxu0
        %v1837 = vadd.f32 %v1762, %v1836
        %1838 = vmatmul.bf16.gmra.mxu0 %v1552
        %v1839 = vpop.f32.mrf.mxu0
        %v1840 = vadd.f32 %v1765, %v1839
        %v1841 = vpop.f32.mrf.mxu0
        %v1842 = vadd.f32 %v1767, %v1841
        %1843 = vmatmul.bf16.gmra.mxu0 %v1555
        %v1844 = vpop.f32.mrf.mxu0
        %v1845 = vadd.f32 %v1770, %v1844
        %v1846 = vpop.f32.mrf.mxu0
        %v1847 = vadd.f32 %v1772, %v1846
        %1848 = vmatmul.bf16.gmra.mxu0 %v1558
        %v1849 = vpop.f32.mrf.mxu0
        %v1850 = vadd.f32 %v1775, %v1849
        %v1851 = vpop.f32.mrf.mxu0
        %v1852 = vadd.f32 %v1777, %v1851
        %1853 = vmatmul.bf16.gmra.mxu0 %v1561
        %v1854 = vpop.f32.mrf.mxu0
        %v1855 = vadd.f32 %v1780, %v1854
        %v1856 = vpop.f32.mrf.mxu0
        %v1857 = vadd.f32 %v1782, %v1856
        %1858 = vmatmul.bf16.gmra.mxu0 %v1564
        %v1859 = vpop.f32.mrf.mxu0
        %v1860 = vadd.f32 %v1785, %v1859
        %v1861 = vpop.f32.mrf.mxu0
        %v1862 = vadd.f32 %v1787, %v1861
        %1863 = vmatmul.bf16.gmra.mxu0 %v1567
        %v1864 = vpop.f32.mrf.mxu0
        %v1865 = vadd.f32 %v1790, %v1864
        %v1866 = vpop.f32.mrf.mxu0
        %v1867 = vadd.f32 %v1792, %v1866
        %1868 = vmatmul.bf16.gmra.mxu0 %v1570
        %v1869 = vpop.f32.mrf.mxu0
        %v1870 = vadd.f32 %v1795, %v1869
        %v1871 = vpop.f32.mrf.mxu0
        %v1872 = vadd.f32 %v1797, %v1871
        %1873 = vmatmul.bf16.gmra.mxu0 %v1573
        %v1874 = vpop.f32.mrf.mxu0
        %v1875 = vadd.f32 %v1800, %v1874
        %v1876 = vpop.f32.mrf.mxu0
        %v1877 = vadd.f32 %v1802, %v1876
        %1878 = vdwg.mxu0
        %1903 = vrot.lane.b32.xlu0 %v1667, 64
        %v1904 = vpop.permute.xlu0 %1903
        %1905 = vrot.lane.b32.xlu0 %v1669, 64
        %v1906 = vpop.permute.xlu0 %1905
        %1907 = vrot.lane.b32.xlu0 %v1672, 64
        %v1908 = vpop.permute.xlu0 %1907
        %1909 = vrot.lane.b32.xlu0 %v1674, 64
        %v1910 = vpop.permute.xlu0 %1909
        %1911 = vrot.lane.b32.xlu0 %v1677, 64
        %v1912 = vpop.permute.xlu0 %1911
        %1913 = vrot.lane.b32.xlu0 %v1679, 64
        %v1914 = vpop.permute.xlu0 %1913
        %1915 = vrot.lane.b32.xlu0 %v1682, 64
        %v1916 = vpop.permute.xlu0 %1915
        %1917 = vrot.lane.b32.xlu0 %v1684, 64
        %v1918 = vpop.permute.xlu0 %1917
        %1919 = vrot.lane.b32.xlu0 %v1687, 64
        %v1920 = vpop.permute.xlu0 %1919
        %1921 = vrot.lane.b32.xlu0 %v1689, 64
        %v1922 = vpop.permute.xlu0 %1921
        %1923 = vrot.lane.b32.xlu0 %v1692, 64
        %v1924 = vpop.permute.xlu0 %1923
        %1925 = vrot.lane.b32.xlu0 %v1694, 64
        %v1926 = vpop.permute.xlu0 %1925
        %1927 = vrot.lane.b32.xlu0 %v1697, 64
        %v1928 = vpop.permute.xlu0 %1927
        %1929 = vrot.lane.b32.xlu0 %v1699, 64
        %v1930 = vpop.permute.xlu0 %1929
        %1931 = vrot.lane.b32.xlu0 %v1702, 64
        %v1932 = vpop.permute.xlu0 %1931
        %1933 = vrot.lane.b32.xlu0 %v1704, 64
        %v1934 = vpop.permute.xlu0 %1933
        %1935 = vrot.lane.b32.xlu0 %v1707, 64
        %v1936 = vpop.permute.xlu0 %1935
        %1937 = vrot.lane.b32.xlu0 %v1709, 64
        %v1938 = vpop.permute.xlu0 %1937
        %1939 = vrot.lane.b32.xlu0 %v1712, 64
        %v1940 = vpop.permute.xlu0 %1939
        %1941 = vrot.lane.b32.xlu0 %v1714, 64
        %v1942 = vpop.permute.xlu0 %1941
        %1943 = vrot.lane.b32.xlu0 %v1717, 64
        %v1944 = vpop.permute.xlu0 %1943
        %1945 = vrot.lane.b32.xlu0 %v1719, 64
        %v1946 = vpop.permute.xlu0 %1945
        %1947 = vrot.lane.b32.xlu0 %v1722, 64
        %v1948 = vpop.permute.xlu0 %1947
        %1949 = vrot.lane.b32.xlu0 %v1724, 64
        %v1950 = vpop.permute.xlu0 %1949
        %v1975 = vadd.f32 %v1662, %v1904
        %v1976 = vadd.f32 %v1664, %v1906
        %v1977 = vadd.f32 %v1667, %v1908
        %v1978 = vadd.f32 %v1669, %v1910
        %v1979 = vadd.f32 %v1672, %v1912
        %v1980 = vadd.f32 %v1674, %v1914
        %v1981 = vadd.f32 %v1677, %v1916
        %v1982 = vadd.f32 %v1679, %v1918
        %v1983 = vadd.f32 %v1682, %v1920
        %v1984 = vadd.f32 %v1684, %v1922
        %v1985 = vadd.f32 %v1687, %v1924
        %v1986 = vadd.f32 %v1689, %v1926
        %v1987 = vadd.f32 %v1692, %v1928
        %v1988 = vadd.f32 %v1694, %v1930
        %v1989 = vadd.f32 %v1697, %v1932
        %v1990 = vadd.f32 %v1699, %v1934
        %v1991 = vadd.f32 %v1702, %v1936
        %v1992 = vadd.f32 %v1704, %v1938
        %v1993 = vadd.f32 %v1707, %v1940
        %v1994 = vadd.f32 %v1709, %v1942
        %v1995 = vadd.f32 %v1712, %v1944
        %v1996 = vadd.f32 %v1714, %v1946
        %v1997 = vadd.f32 %v1717, %v1948
        %v1998 = vadd.f32 %v1719, %v1950
        %v1999 = vadd.f32 %v1975, %v1820
        %v2000 = vadd.f32 %v1976, %v1822
        %v2001 = vadd.f32 %v1977, %v1825
        %v2002 = vadd.f32 %v1978, %v1827
        %v2003 = vadd.f32 %v1979, %v1830
        %v2004 = vadd.f32 %v1980, %v1832
        %v2005 = vadd.f32 %v1981, %v1835
        %v2006 = vadd.f32 %v1982, %v1837
        %v2007 = vadd.f32 %v1983, %v1840
        %v2008 = vadd.f32 %v1984, %v1842
        %v2009 = vadd.f32 %v1985, %v1845
        %v2010 = vadd.f32 %v1986, %v1847
        %v2011 = vadd.f32 %v1987, %v1850
        %v2012 = vadd.f32 %v1988, %v1852
        %v2013 = vadd.f32 %v1989, %v1855
        %v2014 = vadd.f32 %v1990, %v1857
        %v2015 = vadd.f32 %v1991, %v1860
        %v2016 = vadd.f32 %v1992, %v1862
        %v2017 = vadd.f32 %v1993, %v1865
        %v2018 = vadd.f32 %v1994, %v1867
        %v2019 = vadd.f32 %v1995, %v1870
        %v2020 = vadd.f32 %v1996, %v1872
        %v2021 = vadd.f32 %v1997, %v1875
        %v2022 = vadd.f32 %v1998, %v1877
        %v2023 = vld [vmem:[%s4] sm:$0x1]
        %v2025 = vperm.slane %v2023, 0
        %v2027 = vadd.f32 %v1999, %v2025
        %v2028 = vadd.f32 %v2000, %v2025
        %v2029 = vadd.f32 %v2001, %v2025
        %v2030 = vadd.f32 %v2002, %v2025
        %v2031 = vadd.f32 %v2003, %v2025
        %v2032 = vadd.f32 %v2004, %v2025
        %v2033 = vadd.f32 %v2005, %v2025
        %v2034 = vadd.f32 %v2006, %v2025
        %v2035 = vadd.f32 %v2007, %v2025
        %v2036 = vadd.f32 %v2008, %v2025
        %v2037 = vadd.f32 %v2009, %v2025
        %v2038 = vadd.f32 %v2010, %v2025
        %v2039 = vadd.f32 %v2011, %v2025
        %v2040 = vadd.f32 %v2012, %v2025
        %v2041 = vadd.f32 %v2013, %v2025
        %v2042 = vadd.f32 %v2014, %v2025
        %v2043 = vadd.f32 %v2015, %v2025
        %v2044 = vadd.f32 %v2016, %v2025
        %v2045 = vadd.f32 %v2017, %v2025
        %v2046 = vadd.f32 %v2018, %v2025
        %v2047 = vadd.f32 %v2019, %v2025
        %v2048 = vadd.f32 %v2020, %v2025
        %v2049 = vadd.f32 %v2021, %v2025
        %v2050 = vadd.f32 %v2022, %v2025
        %v2051 = vmax.f32 %v2027, 0.0
        %v2052 = vmax.f32 %v2028, 0.0
        %v2053 = vmax.f32 %v2029, 0.0
        %v2054 = vmax.f32 %v2030, 0.0
        %v2055 = vmax.f32 %v2031, 0.0
        %v2056 = vmax.f32 %v2032, 0.0
        %v2057 = vmax.f32 %v2033, 0.0
        %v2058 = vmax.f32 %v2034, 0.0
        %v2059 = vmax.f32 %v2035, 0.0
        %v2060 = vmax.f32 %v2036, 0.0
        %v2061 = vmax.f32 %v2037, 0.0
        %v2062 = vmax.f32 %v2038, 0.0
        %v2063 = vmax.f32 %v2039, 0.0
        %v2064 = vmax.f32 %v2040, 0.0
        %v2065 = vmax.f32 %v2041, 0.0
        %v2066 = vmax.f32 %v2042, 0.0
        %v2067 = vmax.f32 %v2043, 0.0
        %v2068 = vmax.f32 %v2044, 0.0
        %v2069 = vmax.f32 %v2045, 0.0
        %v2070 = vmax.f32 %v2046, 0.0
        %v2071 = vmax.f32 %v2047, 0.0
        %v2072 = vmax.f32 %v2048, 0.0
        %v2073 = vmax.f32 %v2049, 0.0
        %v2074 = vmax.f32 %v2050, 0.0
        %v2075 = vmax.f32 %v2051, %v2053
        %v2076 = vmax.f32 %v2052, %v2054
        %v2077 = vmax.f32 %v2055, %v2057
        %v2078 = vmax.f32 %v2056, %v2058
        %v2079 = vmax.f32 %v2059, %v2061
        %v2080 = vmax.f32 %v2060, %v2062
        %v2081 = vmax.f32 %v2063, %v2065
        %v2082 = vmax.f32 %v2064, %v2066
        %v2083 = vmax.f32 %v2067, %v2069
        %v2084 = vmax.f32 %v2068, %v2070
        %v2085 = vmax.f32 %v2071, %v2073
        %v2086 = vmax.f32 %v2072, %v2074
        %v2099 = vrot.slane %v2075, 2
        %v2100 = vrot.slane %v2075, 4
        %v2101 = vrot.slane %v2075, 6
        %v2102 = vrot.slane %v2076, 2
        %v2103 = vrot.slane %v2076, 4
        %v2104 = vrot.slane %v2076, 6
        %v2105 = vrot.slane %v2077, 2
        %v2106 = vrot.slane %v2077, 4
        %v2107 = vrot.slane %v2077, 6
        %v2108 = vrot.slane %v2078, 2
        %v2109 = vrot.slane %v2078, 4
        %v2110 = vrot.slane %v2078, 6
        %v2111 = vrot.slane %v2079, 2
        %v2112 = vrot.slane %v2079, 4
        %v2113 = vrot.slane %v2079, 6
        %v2114 = vrot.slane %v2080, 2
        %v2115 = vrot.slane %v2080, 4
        %v2116 = vrot.slane %v2080, 6
        %v2117 = vrot.slane %v2081, 2
        %v2118 = vrot.slane %v2081, 4
        %v2119 = vrot.slane %v2081, 6
        %v2120 = vrot.slane %v2082, 2
        %v2121 = vrot.slane %v2082, 4
        %v2122 = vrot.slane %v2082, 6
        %v2123 = vrot.slane %v2083, 2
        %v2124 = vrot.slane %v2083, 4
        %v2125 = vrot.slane %v2083, 6
        %v2126 = vrot.slane %v2084, 2
        %v2127 = vrot.slane %v2084, 4
        %v2128 = vrot.slane %v2084, 6
        %v2129 = vrot.slane %v2085, 2
        %v2130 = vrot.slane %v2085, 4
        %v2131 = vrot.slane %v2085, 6
        %v2132 = vrot.slane %v2086, 2
        %v2133 = vrot.slane %v2086, 4
        %v2134 = vrot.slane %v2086, 6
        %v2171 = vrot.slane %v2075, 7
        %v2172 = vrot.slane %v2171, 2
        %v2173 = vrot.slane %v2099, 7
        %v2174 = vrot.slane %v2173, 2
        %v2175 = vrot.slane %v2100, 7
        %v2176 = vrot.slane %v2175, 2
        %v2177 = vrot.slane %v2101, 7
        %v2178 = vrot.slane %v2177, 2
        %v2179 = vrot.slane %v2076, 7
        %v2180 = vrot.slane %v2179, 2
        %v2181 = vrot.slane %v2102, 7
        %v2182 = vrot.slane %v2181, 2
        %v2183 = vrot.slane %v2103, 7
        %v2184 = vrot.slane %v2183, 2
        %v2185 = vrot.slane %v2104, 7
        %v2186 = vrot.slane %v2185, 2
        %v2187 = vrot.slane %v2077, 7
        %v2188 = vrot.slane %v2187, 2
        %v2189 = vrot.slane %v2105, 7
        %v2190 = vrot.slane %v2189, 2
        %v2191 = vrot.slane %v2106, 7
        %v2192 = vrot.slane %v2191, 2
        %v2193 = vrot.slane %v2107, 7
        %v2194 = vrot.slane %v2193, 2
        %v2195 = vrot.slane %v2078, 7
        %v2196 = vrot.slane %v2195, 2
        %v2197 = vrot.slane %v2108, 7
        %v2198 = vrot.slane %v2197, 2
        %v2199 = vrot.slane %v2109, 7
        %v2200 = vrot.slane %v2199, 2
        %v2201 = vrot.slane %v2110, 7
        %v2202 = vrot.slane %v2201, 2
        %v2203 = vrot.slane %v2079, 7
        %v2204 = vrot.slane %v2203, 2
        %v2205 = vrot.slane %v2111, 7
        %v2206 = vrot.slane %v2205, 2
        %v2207 = vrot.slane %v2112, 7
        %v2208 = vrot.slane %v2207, 2
        %v2209 = vrot.slane %v2113, 7
        %v2210 = vrot.slane %v2209, 2
        %v2211 = vrot.slane %v2080, 7
        %v2212 = vrot.slane %v2211, 2
        %v2213 = vrot.slane %v2114, 7
        %v2214 = vrot.slane %v2213, 2
        %v2215 = vrot.slane %v2115, 7
        %v2216 = vrot.slane %v2215, 2
        %v2217 = vrot.slane %v2116, 7
        %v2218 = vrot.slane %v2217, 2
        %v2219 = vrot.slane %v2081, 7
        %v2220 = vrot.slane %v2219, 2
        %v2221 = vrot.slane %v2117, 7
        %v2222 = vrot.slane %v2221, 2
        %v2223 = vrot.slane %v2118, 7
        %v2224 = vrot.slane %v2223, 2
        %v2225 = vrot.slane %v2119, 7
        %v2226 = vrot.slane %v2225, 2
        %v2227 = vrot.slane %v2082, 7
        %v2228 = vrot.slane %v2227, 2
        %v2229 = vrot.slane %v2120, 7
        %v2230 = vrot.slane %v2229, 2
        %v2231 = vrot.slane %v2121, 7
        %v2232 = vrot.slane %v2231, 2
        %v2233 = vrot.slane %v2122, 7
        %v2234 = vrot.slane %v2233, 2
        %v2235 = vrot.slane %v2083, 7
        %v2236 = vrot.slane %v2235, 2
        %v2237 = vrot.slane %v2123, 7
        %v2238 = vrot.slane %v2237, 2
        %v2239 = vrot.slane %v2124, 7
        %v2240 = vrot.slane %v2239, 2
        %v2241 = vrot.slane %v2125, 7
        %v2242 = vrot.slane %v2241, 2
        %v2243 = vrot.slane %v2084, 7
        %v2244 = vrot.slane %v2243, 2
        %v2245 = vrot.slane %v2126, 7
        %v2246 = vrot.slane %v2245, 2
        %v2247 = vrot.slane %v2127, 7
        %v2248 = vrot.slane %v2247, 2
        %v2249 = vrot.slane %v2128, 7
        %v2250 = vrot.slane %v2249, 2
        %v2251 = vrot.slane %v2085, 7
        %v2252 = vrot.slane %v2251, 2
        %v2253 = vrot.slane %v2129, 7
        %v2254 = vrot.slane %v2253, 2
        %v2255 = vrot.slane %v2130, 7
        %v2256 = vrot.slane %v2255, 2
        %v2257 = vrot.slane %v2131, 7
        %v2258 = vrot.slane %v2257, 2
        %v2259 = vrot.slane %v2086, 7
        %v2260 = vrot.slane %v2259, 2
        %v2261 = vrot.slane %v2132, 7
        %v2262 = vrot.slane %v2261, 2
        %v2263 = vrot.slane %v2133, 7
        %v2264 = vrot.slane %v2263, 2
        %v2265 = vrot.slane %v2134, 7
        %v2266 = vrot.slane %v2265, 2
        %v2315 = vmax.f32 %v2075, %v2172
        %v2316 = vmax.f32 %v2099, %v2174
        %v2317 = vmax.f32 %v2100, %v2176
        %v2318 = vmax.f32 %v2101, %v2178
        %v2319 = vmax.f32 %v2076, %v2180
        %v2320 = vmax.f32 %v2102, %v2182
        %v2321 = vmax.f32 %v2103, %v2184
        %v2322 = vmax.f32 %v2104, %v2186
        %v2323 = vmax.f32 %v2077, %v2188
        %v2324 = vmax.f32 %v2105, %v2190
        %v2325 = vmax.f32 %v2106, %v2192
        %v2326 = vmax.f32 %v2107, %v2194
        %v2327 = vmax.f32 %v2078, %v2196
        %v2328 = vmax.f32 %v2108, %v2198
        %v2329 = vmax.f32 %v2109, %v2200
        %v2330 = vmax.f32 %v2110, %v2202
        %v2331 = vmax.f32 %v2079, %v2204
        %v2332 = vmax.f32 %v2111, %v2206
        %v2333 = vmax.f32 %v2112, %v2208
        %v2334 = vmax.f32 %v2113, %v2210
        %v2335 = vmax.f32 %v2080, %v2212
        %v2336 = vmax.f32 %v2114, %v2214
        %v2337 = vmax.f32 %v2115, %v2216
        %v2338 = vmax.f32 %v2116, %v2218
        %v2339 = vmax.f32 %v2081, %v2220
        %v2340 = vmax.f32 %v2117, %v2222
        %v2341 = vmax.f32 %v2118, %v2224
        %v2342 = vmax.f32 %v2119, %v2226
        %v2343 = vmax.f32 %v2082, %v2228
        %v2344 = vmax.f32 %v2120, %v2230
        %v2345 = vmax.f32 %v2121, %v2232
        %v2346 = vmax.f32 %v2122, %v2234
        %v2347 = vmax.f32 %v2083, %v2236
        %v2348 = vmax.f32 %v2123, %v2238
        %v2349 = vmax.f32 %v2124, %v2240
        %v2350 = vmax.f32 %v2125, %v2242
        %v2351 = vmax.f32 %v2084, %v2244
        %v2352 = vmax.f32 %v2126, %v2246
        %v2353 = vmax.f32 %v2127, %v2248
        %v2354 = vmax.f32 %v2128, %v2250
        %v2355 = vmax.f32 %v2085, %v2252
        %v2356 = vmax.f32 %v2129, %v2254
        %v2357 = vmax.f32 %v2130, %v2256
        %v2358 = vmax.f32 %v2131, %v2258
        %v2359 = vmax.f32 %v2086, %v2260
        %v2360 = vmax.f32 %v2132, %v2262
        %v2361 = vmax.f32 %v2133, %v2264
        %v2362 = vmax.f32 %v2134, %v2266
        %s2363 = smul.u32 %s26, 4
        %s2364 = ssub.s32 %s2363, 1
        %v2365 = vstv %s2364
        %v2366 = vadd.s32 %v2365, 1
        %v2367 = vadd.s32 %v2365, 2
        %v2368 = vadd.s32 %v2365, 3
        %v2369 = vadd.s32 %v2365, 4
        %v2370 = vadd.s32 %v2365, 5
        %vm2371 = vcmp.ge.s32.totalorder %v2365, 0
        %vm2372 = vcmp.ge.s32.totalorder %v2366, 0
        %vm2373 = vcmp.ge.s32.totalorder %v2367, 0
        %vm2374 = vcmp.ge.s32.totalorder %v2368, 0
        %vm2375 = vcmp.ge.s32.totalorder %v2369, 0
        %vm2376 = vcmp.ge.s32.totalorder %v2370, 0
        %vm2377 = vcmp.lt.s32.totalorder %v2365, 8
        %vm2378 = vcmp.lt.s32.totalorder %v2366, 8
        %vm2379 = vcmp.lt.s32.totalorder %v2367, 8
        %vm2380 = vcmp.lt.s32.totalorder %v2368, 8
        %vm2381 = vcmp.lt.s32.totalorder %v2369, 8
        %vm2382 = vcmp.lt.s32.totalorder %v2370, 8
        %vm2383 = vmand %vm2371, %vm2377
        %vm2384 = vmand %vm2372, %vm2378
        %vm2385 = vmand %vm2373, %vm2379
        %vm2386 = vmand %vm2374, %vm2380
        %vm2387 = vmand %vm2375, %vm2381
        %vm2388 = vmand %vm2376, %vm2382
        %v2389 = vsel %vm2383, 1, 0
        %v2390 = vsel %vm2384, 1, 0
        %v2391 = vsel %vm2385, 1, 0
        %v2392 = vsel %vm2386, 1, 0
        %v2393 = vsel %vm2387, 1, 0
        %v2394 = vsel %vm2388, 1, 0
        %vm2395 = vcmp.eq.s32.totalorder %v2389, 1
        %vm2396 = vcmp.eq.s32.totalorder %v2390, 1
        %vm2397 = vcmp.eq.s32.totalorder %v2391, 1
        %vm2398 = vcmp.eq.s32.totalorder %v2392, 1
        %vm2399 = vcmp.eq.s32.totalorder %v2393, 1
        %vm2400 = vcmp.eq.s32.totalorder %v2394, 1
        %v2401 = vsel %vm2395, %v2315, 0.0
        %v2402 = vsel %vm2395, %v2316, 0.0
        %v2403 = vsel %vm2395, %v2317, 0.0
        %v2404 = vsel %vm2395, %v2318, 0.0
        %v2405 = vsel %vm2395, %v2319, 0.0
        %v2406 = vsel %vm2395, %v2320, 0.0
        %v2407 = vsel %vm2395, %v2321, 0.0
        %v2408 = vsel %vm2395, %v2322, 0.0
        %v2409 = vsel %vm2396, %v2323, 0.0
        %v2410 = vsel %vm2396, %v2324, 0.0
        %v2411 = vsel %vm2396, %v2325, 0.0
        %v2412 = vsel %vm2396, %v2326, 0.0
        %v2413 = vsel %vm2396, %v2327, 0.0
        %v2414 = vsel %vm2396, %v2328, 0.0
        %v2415 = vsel %vm2396, %v2329, 0.0
        %v2416 = vsel %vm2396, %v2330, 0.0
        %v2417 = vsel %vm2397, %v2331, 0.0
        %v2418 = vsel %vm2397, %v2332, 0.0
        %v2419 = vsel %vm2397, %v2333, 0.0
        %v2420 = vsel %vm2397, %v2334, 0.0
        %v2421 = vsel %vm2397, %v2335, 0.0
        %v2422 = vsel %vm2397, %v2336, 0.0
        %v2423 = vsel %vm2397, %v2337, 0.0
        %v2424 = vsel %vm2397, %v2338, 0.0
        %v2425 = vsel %vm2398, %v2339, 0.0
        %v2426 = vsel %vm2398, %v2340, 0.0
        %v2427 = vsel %vm2398, %v2341, 0.0
        %v2428 = vsel %vm2398, %v2342, 0.0
        %v2429 = vsel %vm2398, %v2343, 0.0
        %v2430 = vsel %vm2398, %v2344, 0.0
        %v2431 = vsel %vm2398, %v2345, 0.0
        %v2432 = vsel %vm2398, %v2346, 0.0
        %v2433 = vsel %vm2399, %v2347, 0.0
        %v2434 = vsel %vm2399, %v2348, 0.0
        %v2435 = vsel %vm2399, %v2349, 0.0
        %v2436 = vsel %vm2399, %v2350, 0.0
        %v2437 = vsel %vm2399, %v2351, 0.0
        %v2438 = vsel %vm2399, %v2352, 0.0
        %v2439 = vsel %vm2399, %v2353, 0.0
        %v2440 = vsel %vm2399, %v2354, 0.0
        %v2441 = vsel %vm2400, %v2355, 0.0
        %v2442 = vsel %vm2400, %v2356, 0.0
        %v2443 = vsel %vm2400, %v2357, 0.0
        %v2444 = vsel %vm2400, %v2358, 0.0
        %v2445 = vsel %vm2400, %v2359, 0.0
        %v2446 = vsel %vm2400, %v2360, 0.0
        %v2447 = vsel %vm2400, %v2361, 0.0
        %v2448 = vsel %vm2400, %v2362, 0.0
        %v2449 = vpack.c.bf16 %v2401, %v2401
        %v2450 = vpack.c.bf16 %v2402, %v2402
        %v2451 = vpack.c.bf16 %v2403, %v2403
        %v2452 = vpack.c.bf16 %v2404, %v2404
        %v2453 = vpack.c.bf16 %v2405, %v2405
        %v2454 = vpack.c.bf16 %v2406, %v2406
        %v2455 = vpack.c.bf16 %v2407, %v2407
        %v2456 = vpack.c.bf16 %v2408, %v2408
        %v2457 = vpack.c.bf16 %v2409, %v2409
        %v2458 = vpack.c.bf16 %v2410, %v2410
        %v2459 = vpack.c.bf16 %v2411, %v2411
        %v2460 = vpack.c.bf16 %v2412, %v2412
        %v2461 = vpack.c.bf16 %v2413, %v2413
        %v2462 = vpack.c.bf16 %v2414, %v2414
        %v2463 = vpack.c.bf16 %v2415, %v2415
        %v2464 = vpack.c.bf16 %v2416, %v2416
        %v2465 = vpack.c.bf16 %v2417, %v2417
        %v2466 = vpack.c.bf16 %v2418, %v2418
        %v2467 = vpack.c.bf16 %v2419, %v2419
        %v2468 = vpack.c.bf16 %v2420, %v2420
        %v2469 = vpack.c.bf16 %v2421, %v2421
        %v2470 = vpack.c.bf16 %v2422, %v2422
        %v2471 = vpack.c.bf16 %v2423, %v2423
        %v2472 = vpack.c.bf16 %v2424, %v2424
        %v2473 = vpack.c.bf16 %v2425, %v2425
        %v2474 = vpack.c.bf16 %v2426, %v2426
        %v2475 = vpack.c.bf16 %v2427, %v2427
        %v2476 = vpack.c.bf16 %v2428, %v2428
        %v2477 = vpack.c.bf16 %v2429, %v2429
        %v2478 = vpack.c.bf16 %v2430, %v2430
        %v2479 = vpack.c.bf16 %v2431, %v2431
        %v2480 = vpack.c.bf16 %v2432, %v2432
        %v2481 = vpack.c.bf16 %v2433, %v2433
        %v2482 = vpack.c.bf16 %v2434, %v2434
        %v2483 = vpack.c.bf16 %v2435, %v2435
        %v2484 = vpack.c.bf16 %v2436, %v2436
        %v2485 = vpack.c.bf16 %v2437, %v2437
        %v2486 = vpack.c.bf16 %v2438, %v2438
        %v2487 = vpack.c.bf16 %v2439, %v2439
        %v2488 = vpack.c.bf16 %v2440, %v2440
        %v2489 = vpack.c.bf16 %v2441, %v2441
        %v2490 = vpack.c.bf16 %v2442, %v2442
        %v2491 = vpack.c.bf16 %v2443, %v2443
        %v2492 = vpack.c.bf16 %v2444, %v2444
        %v2493 = vpack.c.bf16 %v2445, %v2445
        %v2494 = vpack.c.bf16 %v2446, %v2446
        %v2495 = vpack.c.bf16 %v2447, %v2447
        %v2496 = vpack.c.bf16 %v2448, %v2448
        %v2545 = vunpack.c.l.b16 %v2449
        %v2546 = vunpack.c.l.b16 %v2450
        %v2547 = vunpack.c.l.b16 %v2451
        %v2548 = vunpack.c.l.b16 %v2452
        %v2549 = vunpack.c.l.b16 %v2453
        %v2550 = vunpack.c.l.b16 %v2454
        %v2551 = vunpack.c.l.b16 %v2455
        %v2552 = vunpack.c.l.b16 %v2456
        %v2553 = vunpack.c.l.b16 %v2457
        %v2554 = vunpack.c.l.b16 %v2458
        %v2555 = vunpack.c.l.b16 %v2459
        %v2556 = vunpack.c.l.b16 %v2460
        %v2557 = vunpack.c.l.b16 %v2461
        %v2558 = vunpack.c.l.b16 %v2462
        %v2559 = vunpack.c.l.b16 %v2463
        %v2560 = vunpack.c.l.b16 %v2464
        %v2561 = vunpack.c.l.b16 %v2465
        %v2562 = vunpack.c.l.b16 %v2466
        %v2563 = vunpack.c.l.b16 %v2467
        %v2564 = vunpack.c.l.b16 %v2468
        %v2565 = vunpack.c.l.b16 %v2469
        %v2566 = vunpack.c.l.b16 %v2470
        %v2567 = vunpack.c.l.b16 %v2471
        %v2568 = vunpack.c.l.b16 %v2472
        %v2569 = vunpack.c.l.b16 %v2473
        %v2570 = vunpack.c.l.b16 %v2474
        %v2571 = vunpack.c.l.b16 %v2475
        %v2572 = vunpack.c.l.b16 %v2476
        %v2573 = vunpack.c.l.b16 %v2477
        %v2574 = vunpack.c.l.b16 %v2478
        %v2575 = vunpack.c.l.b16 %v2479
        %v2576 = vunpack.c.l.b16 %v2480
        %v2577 = vunpack.c.l.b16 %v2481
        %v2578 = vunpack.c.l.b16 %v2482
        %v2579 = vunpack.c.l.b16 %v2483
        %v2580 = vunpack.c.l.b16 %v2484
        %v2581 = vunpack.c.l.b16 %v2485
        %v2582 = vunpack.c.l.b16 %v2486
        %v2583 = vunpack.c.l.b16 %v2487
        %v2584 = vunpack.c.l.b16 %v2488
        %v2585 = vunpack.c.l.b16 %v2489
        %v2586 = vunpack.c.l.b16 %v2490
        %v2587 = vunpack.c.l.b16 %v2491
        %v2588 = vunpack.c.l.b16 %v2492
        %v2589 = vunpack.c.l.b16 %v2493
        %v2590 = vunpack.c.l.b16 %v2494
        %v2591 = vunpack.c.l.b16 %v2495
        %v2592 = vunpack.c.l.b16 %v2496
        %v2593 = vpack.c.b16 %v2545, %v2545
        %v2594 = vpack.c.b16 %v2546, %v2546
        %v2595 = vpack.c.b16 %v2547, %v2547
        %v2596 = vpack.c.b16 %v2548, %v2548
        %v2597 = vpack.c.b16 %v2549, %v2549
        %v2598 = vpack.c.b16 %v2550, %v2550
        %v2599 = vpack.c.b16 %v2551, %v2551
        %v2600 = vpack.c.b16 %v2552, %v2552
        %v2601 = vpack.c.b16 %v2553, %v2553
        %v2602 = vpack.c.b16 %v2554, %v2554
        %v2603 = vpack.c.b16 %v2555, %v2555
        %v2604 = vpack.c.b16 %v2556, %v2556
        %v2605 = vpack.c.b16 %v2557, %v2557
        %v2606 = vpack.c.b16 %v2558, %v2558
        %v2607 = vpack.c.b16 %v2559, %v2559
        %v2608 = vpack.c.b16 %v2560, %v2560
        %v2609 = vpack.c.b16 %v2561, %v2561
        %v2610 = vpack.c.b16 %v2562, %v2562
        %v2611 = vpack.c.b16 %v2563, %v2563
        %v2612 = vpack.c.b16 %v2564, %v2564
        %v2613 = vpack.c.b16 %v2565, %v2565
        %v2614 = vpack.c.b16 %v2566, %v2566
        %v2615 = vpack.c.b16 %v2567, %v2567
        %v2616 = vpack.c.b16 %v2568, %v2568
        %v2617 = vpack.c.b16 %v2569, %v2569
        %v2618 = vpack.c.b16 %v2570, %v2570
        %v2619 = vpack.c.b16 %v2571, %v2571
        %v2620 = vpack.c.b16 %v2572, %v2572
        %v2621 = vpack.c.b16 %v2573, %v2573
        %v2622 = vpack.c.b16 %v2574, %v2574
        %v2623 = vpack.c.b16 %v2575, %v2575
        %v2624 = vpack.c.b16 %v2576, %v2576
        %v2625 = vpack.c.b16 %v2577, %v2577
        %v2626 = vpack.c.b16 %v2578, %v2578
        %v2627 = vpack.c.b16 %v2579, %v2579
        %v2628 = vpack.c.b16 %v2580, %v2580
        %v2629 = vpack.c.b16 %v2581, %v2581
        %v2630 = vpack.c.b16 %v2582, %v2582
        %v2631 = vpack.c.b16 %v2583, %v2583
        %v2632 = vpack.c.b16 %v2584, %v2584
        %v2633 = vpack.c.b16 %v2585, %v2585
        %v2634 = vpack.c.b16 %v2586, %v2586
        %v2635 = vpack.c.b16 %v2587, %v2587
        %v2636 = vpack.c.b16 %v2588, %v2588
        %v2637 = vpack.c.b16 %v2589, %v2589
        %v2638 = vpack.c.b16 %v2590, %v2590
        %v2639 = vpack.c.b16 %v2591, %v2591
        %v2640 = vpack.c.b16 %v2592, %v2592
        %v2641 = vunpack.c.l.b16 %v2593
        %v2642 = vunpack.c.l.b16 %v2594
        %v2643 = vunpack.c.l.b16 %v2595
        %v2644 = vunpack.c.l.b16 %v2596
        %v2645 = vunpack.c.l.b16 %v2597
        %v2646 = vunpack.c.l.b16 %v2598
        %v2647 = vunpack.c.l.b16 %v2599
        %v2648 = vunpack.c.l.b16 %v2600
        %v2649 = vunpack.c.l.b16 %v2601
        %v2650 = vunpack.c.l.b16 %v2602
        %v2651 = vunpack.c.l.b16 %v2603
        %v2652 = vunpack.c.l.b16 %v2604
        %v2653 = vunpack.c.l.b16 %v2605
        %v2654 = vunpack.c.l.b16 %v2606
        %v2655 = vunpack.c.l.b16 %v2607
        %v2656 = vunpack.c.l.b16 %v2608
        %v2657 = vunpack.c.l.b16 %v2609
        %v2658 = vunpack.c.l.b16 %v2610
        %v2659 = vunpack.c.l.b16 %v2611
        %v2660 = vunpack.c.l.b16 %v2612
        %v2661 = vunpack.c.l.b16 %v2613
        %v2662 = vunpack.c.l.b16 %v2614
        %v2663 = vunpack.c.l.b16 %v2615
        %v2664 = vunpack.c.l.b16 %v2616
        %v2665 = vunpack.c.l.b16 %v2617
        %v2666 = vunpack.c.l.b16 %v2618
        %v2667 = vunpack.c.l.b16 %v2619
        %v2668 = vunpack.c.l.b16 %v2620
        %v2669 = vunpack.c.l.b16 %v2621
        %v2670 = vunpack.c.l.b16 %v2622
        %v2671 = vunpack.c.l.b16 %v2623
        %v2672 = vunpack.c.l.b16 %v2624
        %v2673 = vunpack.c.l.b16 %v2625
        %v2674 = vunpack.c.l.b16 %v2626
        %v2675 = vunpack.c.l.b16 %v2627
        %v2676 = vunpack.c.l.b16 %v2628
        %v2677 = vunpack.c.l.b16 %v2629
        %v2678 = vunpack.c.l.b16 %v2630
        %v2679 = vunpack.c.l.b16 %v2631
        %v2680 = vunpack.c.l.b16 %v2632
        %v2681 = vunpack.c.l.b16 %v2633
        %v2682 = vunpack.c.l.b16 %v2634
        %v2683 = vunpack.c.l.b16 %v2635
        %v2684 = vunpack.c.l.b16 %v2636
        %v2685 = vunpack.c.l.b16 %v2637
        %v2686 = vunpack.c.l.b16 %v2638
        %v2687 = vunpack.c.l.b16 %v2639
        %v2688 = vunpack.c.l.b16 %v2640
        %v2689 = vrot.slane %v2641, 7
        %v2690 = vrot.slane %v2642, 6
        %vm2691 = vcmask 1042434
        %v2692 = vsel %vm2691, %v2690, %v2689
        %v2693 = vrot.slane %v2643, 5
        %vm2694 = vcmask 1043459
        %v2695 = vsel %vm2694, %v2693, %v2692
        %v2696 = vrot.slane %v2644, 4
        %vm2697 = vcmask 1044484
        %v2698 = vsel %vm2697, %v2696, %v2695
        %v2699 = vrot.slane %v2645, 3
        %vm2700 = vcmask 1045509
        %v2701 = vsel %vm2700, %v2699, %v2698
        %v2702 = vrot.slane %v2646, 2
        %vm2703 = vcmask 1046534
        %v2704 = vsel %vm2703, %v2702, %v2701
        %v2705 = vrot.slane %v2647, 1
        %vm2706 = vcmask 1047559
        %v2707 = vsel %vm2706, %v2705, %v2704
        %v2708 = vrot.slane %v2649, 7
        %v2709 = vrot.slane %v2650, 6
        %v2710 = vsel %vm2691, %v2709, %v2708
        %v2711 = vrot.slane %v2651, 5
        %v2712 = vsel %vm2694, %v2711, %v2710
        %v2713 = vrot.slane %v2652, 4
        %v2714 = vsel %vm2697, %v2713, %v2712
        %v2715 = vrot.slane %v2653, 3
        %v2716 = vsel %vm2700, %v2715, %v2714
        %v2717 = vrot.slane %v2654, 2
        %v2718 = vsel %vm2703, %v2717, %v2716
        %v2719 = vrot.slane %v2655, 1
        %v2720 = vsel %vm2706, %v2719, %v2718
        %v2721 = vrot.slane %v2657, 7
        %v2722 = vrot.slane %v2658, 6
        %v2723 = vsel %vm2691, %v2722, %v2721
        %v2724 = vrot.slane %v2659, 5
        %v2725 = vsel %vm2694, %v2724, %v2723
        %v2726 = vrot.slane %v2660, 4
        %v2727 = vsel %vm2697, %v2726, %v2725
        %v2728 = vrot.slane %v2661, 3
        %v2729 = vsel %vm2700, %v2728, %v2727
        %v2730 = vrot.slane %v2662, 2
        %v2731 = vsel %vm2703, %v2730, %v2729
        %v2732 = vrot.slane %v2663, 1
        %v2733 = vsel %vm2706, %v2732, %v2731
        %v2734 = vrot.slane %v2665, 7
        %v2735 = vrot.slane %v2666, 6
        %v2736 = vsel %vm2691, %v2735, %v2734
        %v2737 = vrot.slane %v2667, 5
        %v2738 = vsel %vm2694, %v2737, %v2736
        %v2739 = vrot.slane %v2668, 4
        %v2740 = vsel %vm2697, %v2739, %v2738
        %v2741 = vrot.slane %v2669, 3
        %v2742 = vsel %vm2700, %v2741, %v2740
        %v2743 = vrot.slane %v2670, 2
        %v2744 = vsel %vm2703, %v2743, %v2742
        %v2745 = vrot.slane %v2671, 1
        %v2746 = vsel %vm2706, %v2745, %v2744
        %v2747 = vrot.slane %v2673, 7
        %v2748 = vrot.slane %v2674, 6
        %v2749 = vsel %vm2691, %v2748, %v2747
        %v2750 = vrot.slane %v2675, 5
        %v2751 = vsel %vm2694, %v2750, %v2749
        %v2752 = vrot.slane %v2676, 4
        %v2753 = vsel %vm2697, %v2752, %v2751
        %v2754 = vrot.slane %v2677, 3
        %v2755 = vsel %vm2700, %v2754, %v2753
        %v2756 = vrot.slane %v2678, 2
        %v2757 = vsel %vm2703, %v2756, %v2755
        %v2758 = vrot.slane %v2679, 1
        %v2759 = vsel %vm2706, %v2758, %v2757
        %v2760 = vrot.slane %v2681, 7
        %v2761 = vrot.slane %v2682, 6
        %v2762 = vsel %vm2691, %v2761, %v2760
        %v2763 = vrot.slane %v2683, 5
        %v2764 = vsel %vm2694, %v2763, %v2762
        %v2765 = vrot.slane %v2684, 4
        %v2766 = vsel %vm2697, %v2765, %v2764
        %v2767 = vrot.slane %v2685, 3
        %v2768 = vsel %vm2700, %v2767, %v2766
        %v2769 = vrot.slane %v2686, 2
        %v2770 = vsel %vm2703, %v2769, %v2768
        %v2771 = vrot.slane %v2687, 1
        %v2772 = vsel %vm2706, %v2771, %v2770
        %v2773 = vpack.c.b16 %v2648, %v2707
        %v2774 = vpack.c.b16 %v2656, %v2720
        %v2775 = vpack.c.b16 %v2664, %v2733
        %v2776 = vpack.c.b16 %v2672, %v2746
        %v2777 = vpack.c.b16 %v2680, %v2759
        %v2778 = vpack.c.b16 %v2688, %v2772
        %v2785 = vsel %vm1049, 0, %v2773
        %v2786 = vsel %vm1049, 0, %v2774
        %v2787 = vsel %vm1049, 0, %v2775
        %v2788 = vsel %vm1049, 0, %v2776
        %v2789 = vsel %vm1049, 0, %v2777
        %v2790 = vsel %vm1049, 0, %v2778
        %vm2791 = vcmask 1044480
        %vm2792 = vsmask.f32 4352
        %vm2793 = vmand %vm2791, %vm2792
        %v2794 = vsel %vm2793, %v2785, 0
        %v2795 = vsel %vm2793, %v2786, 0
        %v2796 = vsel %vm2793, %v2787, 0
        %v2797 = vsel %vm2793, %v2788, 0
        %v2798 = vsel %vm2793, %v2789, 0
        %v2799 = vsel %vm2793, %v2790, 0
        %v2801 = vshrl.u32 %v2794, 16
        %v2803 = vshll.u32 %v2794, 16
        %v2805 = vrot.slane %v2803, 1
        %v2806 = vor.u32 %v2801, %v2805
        %v2808 = vshrl.u32 %v2795, 16
        %v2810 = vshll.u32 %v2795, 16
        %v2812 = vrot.slane %v2810, 1
        %v2813 = vor.u32 %v2808, %v2812
        %v2815 = vshrl.u32 %v2796, 16
        %v2817 = vshll.u32 %v2796, 16
        %v2819 = vrot.slane %v2817, 1
        %v2820 = vor.u32 %v2815, %v2819
        %v2822 = vshrl.u32 %v2797, 16
        %v2824 = vshll.u32 %v2797, 16
        %v2826 = vrot.slane %v2824, 1
        %v2827 = vor.u32 %v2822, %v2826
        %v2829 = vshrl.u32 %v2798, 16
        %v2831 = vshll.u32 %v2798, 16
        %v2833 = vrot.slane %v2831, 1
        %v2834 = vor.u32 %v2829, %v2833
        %v2836 = vshrl.u32 %v2799, 16
        %v2838 = vshll.u32 %v2799, 16
        %v2840 = vrot.slane %v2838, 1
        %v2841 = vor.u32 %v2836, %v2840
        %2842 = vrot.lane.b32.xlu0 %v2806, 64
        %v2843 = vpop.permute.xlu0 %2842
        %2844 = vrot.lane.b32.xlu0 %v2813, 64
        %v2845 = vpop.permute.xlu0 %2844
        %2846 = vrot.lane.b32.xlu0 %v2820, 64
        %v2847 = vpop.permute.xlu0 %2846
        %2848 = vrot.lane.b32.xlu0 %v2827, 64
        %v2849 = vpop.permute.xlu0 %2848
        %2850 = vrot.lane.b32.xlu0 %v2834, 64
        %v2851 = vpop.permute.xlu0 %2850
        %2852 = vrot.lane.b32.xlu0 %v2841, 64
        %v2853 = vpop.permute.xlu0 %2852
        %v2860 = vrot.slane %v2794, 1
        %v2861 = vrot.slane %v2795, 1
        %v2862 = vrot.slane %v2796, 1
        %v2863 = vrot.slane %v2797, 1
        %v2864 = vrot.slane %v2798, 1
        %v2865 = vrot.slane %v2799, 1
        %v2867 = vsel %vm1346, %v2794, %v2843
        %v2869 = vsel %vm1346, %v2795, %v2845
        %v2871 = vsel %vm1346, %v2796, %v2847
        %v2873 = vsel %vm1346, %v2797, %v2849
        %v2875 = vsel %vm1346, %v2798, %v2851
        %v2877 = vsel %vm1346, %v2799, %v2853
        %v2884 = vunpack.c.l.b16 %v2867
        %v2885 = vunpack.c.l.b16 %v2860
        %v2886 = vunpack.c.l.b16 %v2869
        %v2887 = vunpack.c.l.b16 %v2861
        %v2888 = vunpack.c.l.b16 %v2871
        %v2889 = vunpack.c.l.b16 %v2862
        %v2890 = vunpack.c.l.b16 %v2873
        %v2891 = vunpack.c.l.b16 %v2863
        %v2892 = vunpack.c.l.b16 %v2875
        %v2893 = vunpack.c.l.b16 %v2864
        %v2894 = vunpack.c.l.b16 %v2877
        %v2895 = vunpack.c.l.b16 %v2865
        %v2896 = vld [vmem:[%s5] sm:$0xff]
        %v2897 = vld [vmem:[%s5 + $0x8] sm:$0xf]
        %v2898 = vld [vmem:[%s5 + $0xc] sm:$0xff]
        %v2899 = vld [vmem:[%s5 + $0x14] sm:$0xf]
        %v2900 = vld [vmem:[%s5 + $0x18] sm:$0xff]
        %v2901 = vld [vmem:[%s5 + $0x20] sm:$0xf]
        %v2902 = vld [vmem:[%s5 + $0x24] sm:$0xff]
        %v2903 = vld [vmem:[%s5 + $0x2c] sm:$0xf]
        %v2904 = vld [vmem:[%s5 + $0x30] sm:$0xff]
        %v2905 = vld [vmem:[%s5 + $0x38] sm:$0xf]
        %v2906 = vld [vmem:[%s5 + $0x3c] sm:$0xff]
        %v2907 = vld [vmem:[%s5 + $0x44] sm:$0xf]
        %v2908 = vld [vmem:[%s5 + $0x48] sm:$0xff]
        %v2909 = vld [vmem:[%s5 + $0x50] sm:$0xf]
        %v2910 = vld [vmem:[%s5 + $0x54] sm:$0xff]
        %v2911 = vld [vmem:[%s5 + $0x5c] sm:$0xf]
        %v2912 = vld [vmem:[%s5 + $0x60] sm:$0xff]
        %v2913 = vld [vmem:[%s5 + $0x68] sm:$0xf]
        %v2914 = vld [vmem:[%s5 + $0x6c] sm:$0xff]
        %v2915 = vld [vmem:[%s5 + $0x74] sm:$0xf]
        %v2916 = vld [vmem:[%s5 + $0x78] sm:$0xff]
        %v2917 = vld [vmem:[%s5 + $0x80] sm:$0xf]
        %v2918 = vld [vmem:[%s5 + $0x84] sm:$0xff]
        %v2919 = vld [vmem:[%s5 + $0x8c] sm:$0xf]
        %v2920 = vld [vmem:[%s5 + $0x90] sm:$0xff]
        %v2921 = vld [vmem:[%s5 + $0x98] sm:$0xf]
        %v2922 = vld [vmem:[%s5 + $0x9c] sm:$0xff]
        %v2923 = vld [vmem:[%s5 + $0xa4] sm:$0xf]
        %v2924 = vld [vmem:[%s5 + $0xa8] sm:$0xff]
        %v2925 = vld [vmem:[%s5 + $0xb0] sm:$0xf]
        %v2926 = vld [vmem:[%s5 + $0xb4] sm:$0xff]
        %v2927 = vld [vmem:[%s5 + $0xbc] sm:$0xf]
        %v2928 = vld [vmem:[%s5 + $0xc0] sm:$0xff]
        %v2929 = vld [vmem:[%s5 + $0xc8] sm:$0xf]
        %v2930 = vld [vmem:[%s5 + $0xcc] sm:$0xff]
        %v2931 = vld [vmem:[%s5 + $0xd4] sm:$0xf]
        %v2932 = vld [vmem:[%s5 + $0xd8] sm:$0xff]
        %v2933 = vld [vmem:[%s5 + $0xe0] sm:$0xf]
        %v2934 = vld [vmem:[%s5 + $0xe4] sm:$0xff]
        %v2935 = vld [vmem:[%s5 + $0xec] sm:$0xf]
        %v2936 = vld [vmem:[%s5 + $0xf0] sm:$0xff]
        %v2937 = vld [vmem:[%s5 + $0xf8] sm:$0xf]
        %v2938 = vld [vmem:[%s5 + $0xfc] sm:$0xff]
        %v2939 = vld [vmem:[%s5 + $0x104] sm:$0xf]
        %v2940 = vld [vmem:[%s5 + $0x108] sm:$0xff]
        %v2941 = vld [vmem:[%s5 + $0x110] sm:$0xf]
        %v2942 = vld [vmem:[%s5 + $0x114] sm:$0xff]
        %v2943 = vld [vmem:[%s5 + $0x11c] sm:$0xf]
        %v2944 = vpack.c.b16 %v2886, %v2884
        %v2945 = vpack.c.b16 %v2887, %v2885
        %v2946 = vpack.c.b16 %v2890, %v2888
        %v2947 = vpack.c.b16 %v2891, %v2889
        %v2948 = vpack.c.b16 %v2894, %v2892
        %v2949 = vpack.c.b16 %v2895, %v2893
        %v3001 = vunpack.c.l.b16 %v2896
        %v3002 = vunpack.c.h.b16 %v2896
        %v3003 = vunpack.c.l.b16 %v2897
        %v3004 = vunpack.c.l.b16 %v2898
        %v3005 = vunpack.c.h.b16 %v2898
        %v3006 = vunpack.c.l.b16 %v2899
        %v3007 = vunpack.c.l.b16 %v2900
        %v3008 = vunpack.c.h.b16 %v2900
        %v3009 = vunpack.c.l.b16 %v2901
        %v3010 = vunpack.c.l.b16 %v2902
        %v3011 = vunpack.c.h.b16 %v2902
        %v3012 = vunpack.c.l.b16 %v2903
        %v3013 = vunpack.c.l.b16 %v2904
        %v3014 = vunpack.c.h.b16 %v2904
        %v3015 = vunpack.c.l.b16 %v2905
        %v3016 = vunpack.c.l.b16 %v2906
        %v3017 = vunpack.c.h.b16 %v2906
        %v3018 = vunpack.c.l.b16 %v2907
        %v3019 = vunpack.c.l.b16 %v2908
        %v3020 = vunpack.c.h.b16 %v2908
        %v3021 = vunpack.c.l.b16 %v2909
        %v3022 = vunpack.c.l.b16 %v2910
        %v3023 = vunpack.c.h.b16 %v2910
        %v3024 = vunpack.c.l.b16 %v2911
        %v3025 = vunpack.c.l.b16 %v2912
        %v3026 = vunpack.c.h.b16 %v2912
        %v3027 = vunpack.c.l.b16 %v2913
        %v3028 = vunpack.c.l.b16 %v2914
        %v3029 = vunpack.c.h.b16 %v2914
        %v3030 = vunpack.c.l.b16 %v2915
        %v3031 = vunpack.c.l.b16 %v2916
        %v3032 = vunpack.c.h.b16 %v2916
        %v3033 = vunpack.c.l.b16 %v2917
        %v3034 = vunpack.c.l.b16 %v2918
        %v3035 = vunpack.c.h.b16 %v2918
        %v3036 = vunpack.c.l.b16 %v2919
        %v3037 = vunpack.c.l.b16 %v2920
        %v3038 = vunpack.c.h.b16 %v2920
        %v3039 = vunpack.c.l.b16 %v2921
        %v3040 = vunpack.c.l.b16 %v2922
        %v3041 = vunpack.c.h.b16 %v2922
        %v3042 = vunpack.c.l.b16 %v2923
        %v3043 = vunpack.c.l.b16 %v2924
        %v3044 = vunpack.c.h.b16 %v2924
        %v3045 = vunpack.c.l.b16 %v2925
        %v3046 = vunpack.c.l.b16 %v2926
        %v3047 = vunpack.c.h.b16 %v2926
        %v3048 = vunpack.c.l.b16 %v2927
        %v3049 = vunpack.c.l.b16 %v2928
        %v3050 = vunpack.c.h.b16 %v2928
        %v3051 = vunpack.c.l.b16 %v2929
        %v3052 = vunpack.c.l.b16 %v2930
        %v3053 = vunpack.c.h.b16 %v2930
        %v3054 = vunpack.c.l.b16 %v2931
        %v3055 = vunpack.c.l.b16 %v2932
        %v3056 = vunpack.c.h.b16 %v2932
        %v3057 = vunpack.c.l.b16 %v2933
        %v3058 = vunpack.c.l.b16 %v2934
        %v3059 = vunpack.c.h.b16 %v2934
        %v3060 = vunpack.c.l.b16 %v2935
        %v3061 = vunpack.c.l.b16 %v2936
        %v3062 = vunpack.c.h.b16 %v2936
        %v3063 = vunpack.c.l.b16 %v2937
        %v3064 = vunpack.c.l.b16 %v2938
        %v3065 = vunpack.c.h.b16 %v2938
        %v3066 = vunpack.c.l.b16 %v2939
        %v3067 = vunpack.c.l.b16 %v2940
        %v3068 = vunpack.c.h.b16 %v2940
        %v3069 = vunpack.c.l.b16 %v2941
        %v3070 = vunpack.c.l.b16 %v2942
        %v3071 = vunpack.c.h.b16 %v2942
        %v3072 = vunpack.c.l.b16 %v2943
        %v3073 = vpack.c.b16 %v3004, %v3001
        %v3074 = vpack.c.b16 %v3005, %v3002
        %v3075 = vpack.c.b16 %v3006, %v3003
        %v3076 = vpack.c.b16 %v3010, %v3007
        %v3077 = vpack.c.b16 %v3011, %v3008
        %v3078 = vpack.c.b16 %v3012, %v3009
        %v3079 = vpack.c.b16 %v3016, %v3013
        %v3080 = vpack.c.b16 %v3017, %v3014
        %v3081 = vpack.c.b16 %v3018, %v3015
        %v3082 = vpack.c.b16 %v3022, %v3019
        %v3083 = vpack.c.b16 %v3023, %v3020
        %v3084 = vpack.c.b16 %v3024, %v3021
        %v3085 = vpack.c.b16 %v3028, %v3025
        %v3086 = vpack.c.b16 %v3029, %v3026
        %v3087 = vpack.c.b16 %v3030, %v3027
        %v3088 = vpack.c.b16 %v3034, %v3031
        %v3089 = vpack.c.b16 %v3035, %v3032
        %v3090 = vpack.c.b16 %v3036, %v3033
        %v3091 = vpack.c.b16 %v3040, %v3037
        %v3092 = vpack.c.b16 %v3041, %v3038
        %v3093 = vpack.c.b16 %v3042, %v3039
        %v3094 = vpack.c.b16 %v3046, %v3043
        %v3095 = vpack.c.b16 %v3047, %v3044
        %v3096 = vpack.c.b16 %v3048, %v3045
        %v3097 = vpack.c.b16 %v3052, %v3049
        %v3098 = vpack.c.b16 %v3053, %v3050
        %v3099 = vpack.c.b16 %v3054, %v3051
        %v3100 = vpack.c.b16 %v3058, %v3055
        %v3101 = vpack.c.b16 %v3059, %v3056
        %v3102 = vpack.c.b16 %v3060, %v3057
        %v3103 = vpack.c.b16 %v3064, %v3061
        %v3104 = vpack.c.b16 %v3065, %v3062
        %v3105 = vpack.c.b16 %v3066, %v3063
        %v3106 = vpack.c.b16 %v3070, %v3067
        %v3107 = vpack.c.b16 %v3071, %v3068
        %v3108 = vpack.c.b16 %v3072, %v3069
        %v3146 = vsel %vm1346, %v2945, 0
        %v3149 = vsel %vm1346, %v2947, 0
        %v3152 = vsel %vm1346, %v2949, 0
        %3154 = vmatpush.bf16.msra.mxu0 %v3094
        %3155 = vmatpush.bf16.msra.mxu0 %v3091
        %3156 = vmatpush.bf16.msra.mxu0 %v3088
        %3157 = vmatpush.bf16.msra.mxu0 %v3085
        %3158 = vmatpush.bf16.msra.mxu0 %v3082
        %3159 = vmatpush.bf16.msra.mxu0 %v3079
        %3160 = vmatpush.bf16.msra.mxu0 %v3076
        %3161 = vmatpush.bf16.msra.mxu0 %v3073
        %3162 = vmatmul.bf16.gmra.mxu0 %v2944
        %v3163 = vpop.f32.mrf.mxu0
        %v3164 = vadd.f32 0.0, %v3163
        %v3165 = vpop.f32.mrf.mxu0
        %v3166 = vadd.f32 0.0, %v3165
        %3167 = vmatmul.bf16.gmra.mxu0 %v2946
        %v3168 = vpop.f32.mrf.mxu0
        %v3169 = vadd.f32 0.0, %v3168
        %v3170 = vpop.f32.mrf.mxu0
        %v3171 = vadd.f32 0.0, %v3170
        %3172 = vmatmul.bf16.gmra.mxu0 %v2948
        %v3173 = vpop.f32.mrf.mxu0
        %v3174 = vpop.f32.mrf.mxu0
        %3175 = vdwg.mxu0
        %3176 = vmatpush.bf16.msra.mxu0 0
        %3177 = vmatpush.bf16.msra.mxu0 0
        %3178 = vmatpush.bf16.msra.mxu0 0
        %3179 = vmatpush.bf16.msra.mxu0 0
        %3180 = vmatpush.bf16.msra.mxu0 %v3106
        %3181 = vmatpush.bf16.msra.mxu0 %v3103
        %3182 = vmatpush.bf16.msra.mxu0 %v3100
        %3183 = vmatpush.bf16.msra.mxu0 %v3097
        %3184 = vmatmul.bf16.gmra.mxu0 %v3146
        %v3185 = vpop.f32.mrf.mxu0
        %v3186 = vadd.f32 %v3164, %v3185
        %v3187 = vpop.f32.mrf.mxu0
        %v3188 = vadd.f32 %v3166, %v3187
        %3189 = vmatmul.bf16.gmra.mxu0 %v3149
        %v3190 = vpop.f32.mrf.mxu0
        %v3191 = vadd.f32 %v3169, %v3190
        %v3192 = vpop.f32.mrf.mxu0
        %v3193 = vadd.f32 %v3171, %v3192
        %3194 = vmatmul.bf16.gmra.mxu0 %v3152
        %v3195 = vpop.f32.mrf.mxu0
        %v3196 = vpop.f32.mrf.mxu0
        %3197 = vdwg.mxu0
        %3198 = vmatpush.bf16.msra.mxu0 %v3095
        %3199 = vmatpush.bf16.msra.mxu0 %v3092
        %3200 = vmatpush.bf16.msra.mxu0 %v3089
        %3201 = vmatpush.bf16.msra.mxu0 %v3086
        %3202 = vmatpush.bf16.msra.mxu0 %v3083
        %3203 = vmatpush.bf16.msra.mxu0 %v3080
        %3204 = vmatpush.bf16.msra.mxu0 %v3077
        %3205 = vmatpush.bf16.msra.mxu0 %v3074
        %3206 = vmatmul.bf16.gmra.mxu0 %v2944
        %v3207 = vpop.f32.mrf.mxu0
        %v3208 = vpop.f32.mrf.mxu0
        %v3209 = vadd.f32 0.0, %v3208
        %3210 = vmatmul.bf16.gmra.mxu0 %v2946
        %v3211 = vpop.f32.mrf.mxu0
        %v3212 = vadd.f32 0.0, %v3211
        %v3213 = vpop.f32.mrf.mxu0
        %v3214 = vadd.f32 0.0, %v3213
        %3215 = vmatmul.bf16.gmra.mxu0 %v2948
        %v3216 = vpop.f32.mrf.mxu0
        %v3217 = vadd.f32 0.0, %v3216
        %v3218 = vpop.f32.mrf.mxu0
        %3219 = vdwg.mxu0
        %3220 = vmatpush.bf16.msra.mxu0 0
        %3221 = vmatpush.bf16.msra.mxu0 0
        %3222 = vmatpush.bf16.msra.mxu0 0
        %3223 = vmatpush.bf16.msra.mxu0 0
        %3224 = vmatpush.bf16.msra.mxu0 %v3107
        %3225 = vmatpush.bf16.msra.mxu0 %v3104
        %3226 = vmatpush.bf16.msra.mxu0 %v3101
        %3227 = vmatpush.bf16.msra.mxu0 %v3098
        %3228 = vmatmul.bf16.gmra.mxu0 %v3146
        %v3229 = vpop.f32.mrf.mxu0
        %v3230 = vpop.f32.mrf.mxu0
        %v3231 = vadd.f32 %v3209, %v3230
        %3232 = vmatmul.bf16.gmra.mxu0 %v3149
        %v3233 = vpop.f32.mrf.mxu0
        %v3234 = vadd.f32 %v3212, %v3233
        %v3235 = vpop.f32.mrf.mxu0
        %v3236 = vadd.f32 %v3214, %v3235
        %3237 = vmatmul.bf16.gmra.mxu0 %v3152
        %v3238 = vpop.f32.mrf.mxu0
        %v3239 = vadd.f32 %v3217, %v3238
        %v3240 = vpop.f32.mrf.mxu0
        %3241 = vdwg.mxu0
        %3242 = vmatpush.bf16.msra.mxu0 %v3096
        %3243 = vmatpush.bf16.msra.mxu0 %v3093
        %3244 = vmatpush.bf16.msra.mxu0 %v3090
        %3245 = vmatpush.bf16.msra.mxu0 %v3087
        %3246 = vmatpush.bf16.msra.mxu0 %v3084
        %3247 = vmatpush.bf16.msra.mxu0 %v3081
        %3248 = vmatpush.bf16.msra.mxu0 %v3078
        %3249 = vmatpush.bf16.msra.mxu0 %v3075
        %3250 = vmatmul.bf16.gmra.mxu0 %v2944
        %v3251 = vpop.f32.mrf.mxu0
        %v3252 = vpop.f32.mrf.mxu0
        %3253 = vmatmul.bf16.gmra.mxu0 %v2946
        %v3254 = vpop.f32.mrf.mxu0
        %v3255 = vadd.f32 0.0, %v3254
        %v3256 = vpop.f32.mrf.mxu0
        %v3257 = vadd.f32 0.0, %v3256
        %3258 = vmatmul.bf16.gmra.mxu0 %v2948
        %v3259 = vpop.f32.mrf.mxu0
        %v3260 = vadd.f32 0.0, %v3259
        %v3261 = vpop.f32.mrf.mxu0
        %v3262 = vadd.f32 0.0, %v3261
        %3263 = vdwg.mxu0
        %3264 = vmatpush.bf16.msra.mxu0 0
        %3265 = vmatpush.bf16.msra.mxu0 0
        %3266 = vmatpush.bf16.msra.mxu0 0
        %3267 = vmatpush.bf16.msra.mxu0 0
        %3268 = vmatpush.bf16.msra.mxu0 %v3108
        %3269 = vmatpush.bf16.msra.mxu0 %v3105
        %3270 = vmatpush.bf16.msra.mxu0 %v3102
        %3271 = vmatpush.bf16.msra.mxu0 %v3099
        %3272 = vmatmul.bf16.gmra.mxu0 %v3146
        %v3273 = vpop.f32.mrf.mxu0
        %v3274 = vpop.f32.mrf.mxu0
        %3275 = vmatmul.bf16.gmra.mxu0 %v3149
        %v3276 = vpop.f32.mrf.mxu0
        %v3277 = vadd.f32 %v3255, %v3276
        %v3278 = vpop.f32.mrf.mxu0
        %v3279 = vadd.f32 %v3257, %v3278
        %3280 = vmatmul.bf16.gmra.mxu0 %v3152
        %v3281 = vpop.f32.mrf.mxu0
        %v3282 = vadd.f32 %v3260, %v3281
        %v3283 = vpop.f32.mrf.mxu0
        %v3284 = vadd.f32 %v3262, %v3283
        %3285 = vdwg.mxu0
        %v3286 = vadd.f32 %v3186, %v3231
        %v3287 = vadd.f32 %v3188, %v3234
        %v3288 = vadd.f32 %v3191, %v3236
        %v3289 = vadd.f32 %v3193, %v3239
        %v3290 = vadd.f32 %v3286, %v3277
        %v3291 = vadd.f32 %v3287, %v3279
        %v3292 = vadd.f32 %v3288, %v3282
        %v3293 = vadd.f32 %v3289, %v3284
        %v3294 = vld [vmem:[%s6] sm:$0x1]
        %v3296 = vperm.slane %v3294, 0
        %v3298 = vadd.f32 %v3290, %v3296
        %v3299 = vadd.f32 %v3291, %v3296
        %v3300 = vadd.f32 %v3292, %v3296
        %v3301 = vadd.f32 %v3293, %v3296
        %v3302 = vpack.c.bf16 %v3298, %v3298
        %v3303 = vpack.c.bf16 %v3299, %v3299
        %v3304 = vpack.c.bf16 %v3300, %v3300
        %v3305 = vpack.c.bf16 %v3301, %v3301
        %3306 = vst [vmem:[%s295] sm:$0xf] %v3302
        %3307 = vst [vmem:[%s295 + $0x4] sm:$0xf] %v3303
        %3308 = vst [vmem:[%s295 + $0x8] sm:$0xf] %v3304
        %3309 = vst [vmem:[%s295 + $0xc] sm:$0xf] %v3305
        %s3310 = sand.u32 %s199, 1
        %s3311 = scalar_lea.sflag [#allocation3], %s3310
        %s3312 = sand.u32 %s199, 1
        %s3313 = smul.addr %s3312, 16
        %s3314 = scalar_lea.vmem [#allocation2], %s3313
        // Predicated region
        $region49: #{feature_extractor.1} parent=47 // pred_check
          %p3315 = pneg %p209
        $region50: #{feature_extractor.1} parent=47 // pred_check_branch
          %3317 = sbr.rel (%p3315) target = $region52
        $region51: #{feature_extractor.1} parent=47 // pred_region
          %s3318 = smul.u32 4, %s26
          %3320 = vsyncadd %s3311, 0
          %s3321 = smul.addr %s25, 8
          %s3322 = sadd.s32 %s3318, %s3321
          %s3323 = smul.addr %s3322, 4
          %s3324 = scalar_lea.hbm %s7, %s3323
          %s3325 = sshll.u32 %s3314, 4
          %s3326 = int_to_ptr.vmem [resolvable:$true] %s3325
          %s3327 = sshll.u32 %s3324, 4
          %s3328 = int_to_ptr.hbm [resolvable:$true] %s3327
          %3333 = dma.vmem_to_hbm [thread:$0]  %s3326, 256, %s3328, %s3311, 64, 64, 4
        $region52: #{feature_extractor.1} parent=47 // pred_fallthru
          _
      $region48: #{feature_extractor.1} parent=5 // pred_fallthru
        _
      %p3334 = scmp.le.s32.totalorder 2, %s16
      // Predicated region
      $region53: #{feature_extractor.1} parent=5 // pred_check
        %p3335 = pneg %p3334
      $region54: #{feature_extractor.1} parent=5 // pred_check_branch
        %3337 = sbr.rel (%p3335) target = $region56
      $region55: #{feature_extractor.1} parent=5 // pred_region
        %s3338 = ssub.s32 %s16, 2
        // Predicated region
        $region57: #{feature_extractor.1} parent=55 // pred_check
          %p3339 = pneg %p215
        $region58: #{feature_extractor.1} parent=55 // pred_check_branch
          %3341 = sbr.rel (%p3339) target = $region60
        $region59: #{feature_extractor.1} parent=55 // pred_region
          %s3342 = sand.u32 %s200, 1
          %s3343 = scalar_lea.sflag [#allocation3], %s3342
          %s3344 = sand.u32 %s200, 1
          %s3345 = smul.addr %s3344, 16
          %s3346 = scalar_lea.vmem [#allocation2], %s3345
          %3348 = dma.done %s3343, 256
        $region60: #{feature_extractor.1} parent=55 // pred_fallthru
          _
      $region56: #{feature_extractor.1} parent=5 // pred_fallthru
        _
    $region6: #{feature_extractor.1} parent=1 // loop_footer
      %s20 = sadd.s32 1, %s16
    $region7: #{feature_extractor.1} parent=1 // loop_footer_branch
      %15 = sbr.rel target = $region3
    $region8: #{feature_extractor.1} parent=1 // loop_exit
      _
    %3349 = vsyncpa [#allocation3], 1
    %s3350 = scalar_lea.sflag [#allocation3], 1
    %3351 = vsyncpa %s3350, 1

</llo_original>
